<compile_context>
chip_gen: v5e
topology: v5e:2x2
jax: 0.10.0
libtpu: 0.0.40
codegen_flags: <defaults>
</compile_context>

<pallas_src>
import functools

import jax
import jax.numpy as jnp
from jax.experimental import pallas as pl
from jax.experimental.pallas import tpu as pltpu

NEG_SLOPE = 0.2   # VNLinearLeakyReLU default negative_slope
EPS = 1e-6


# ------------------------------ Pallas kernel -------------------------------

def fused_equiv_kernel(x_ref, w1_ref, w2_ref, w3_ref, we_ref, feat_ref, rot_ref):
    """Fused VN-MLP frame + Gram-Schmidt + rotate + VNLinear embed + L2 norm.

    x_ref : (3, TB, N)      bf16  per-component point coords
    w1_ref: (N,  2*N2p)     bf16  [W1_feat | W1_dir]   (lane-padded halves)
    w2_ref: (N2p,2*N4p)     bf16  [W2_feat | W2_dir]   (lane-padded halves)
    w3_ref: (N4p, 3)        f32   frame head (kept f32: tiny + conditioning-sensitive)
    we_ref: (N, F)          bf16  embedding head
    feat_ref: (TB, F)       f32   ||emb||
    rot_ref : (TB, 9)       f32   row-major flattened rotation matrix
    """
    f32 = jnp.float32
    bf16 = jnp.bfloat16
    tb = x_ref.shape[1]
    n = x_ref.shape[2]
    n2p = w1_ref.shape[1] // 2
    n4p = w2_ref.shape[1] // 2
    fdim = we_ref.shape[1]

    x3 = x_ref[...]                                  # (3, TB, N) bf16
    xf = x3.reshape(3 * tb, n)                       # fold 3 components into MXU M

    def vn_leaky(h_bf, w, cout):
        # ONE fused [W_feat | W_dir] matmul for all 3 components (M = 3*TB)
        t = jnp.dot(h_bf, w, preferred_element_type=f32)      # (3*TB, 2*cout)
        p3 = t[:, :cout].reshape(3, tb, cout)                  # lane-aligned split
        d3 = t[:, cout:].reshape(3, tb, cout)
        dot = p3[0] * d3[0] + p3[1] * d3[1] + p3[2] * d3[2]    # (TB, cout)
        dsq = d3[0] * d3[0] + d3[1] * d3[1] + d3[2] * d3[2]
        # VN leaky relu:  out = p                              (dot >= 0)
        #                 out = p - (1-s)*(dot/(dsq+eps))*d    (dot <  0)
        coeff = ((1.0 - NEG_SLOPE) * jnp.minimum(dot, 0.0)
                 * pl.reciprocal(dsq + EPS, approx=True))
        return p3 - coeff * d3                                  # (3, TB, cout) f32

    h1 = vn_leaky(xf, w1_ref[...], n2p)                         # (3, TB, N2p)
    h2 = vn_leaky(h1.reshape(3 * tb, n2p).astype(bf16),
                  w2_ref[...], n4p)                             # (3, TB, N4p)
    # frame head in f32 (padded rows/channels are exactly zero)
    z = jnp.dot(h2.reshape(3 * tb, n4p), w3_ref[...],
                preferred_element_type=f32)                     # (3*TB, 3)
    z3 = z.reshape(3, tb, 3)

    # --- Gram-Schmidt on the first two learned vectors (all elementwise) ---
    v1 = [z3[d, :, 0:1] for d in range(3)]                      # (TB, 1) each
    v2 = [z3[d, :, 1:2] for d in range(3)]
    inv_n1 = jax.lax.rsqrt(v1[0] * v1[0] + v1[1] * v1[1] + v1[2] * v1[2] + EPS)
    u1 = [v1[d] * inv_n1 for d in range(3)]
    dv = v2[0] * u1[0] + v2[1] * u1[1] + v2[2] * u1[2]
    w_ = [v2[d] - dv * u1[d] for d in range(3)]
    inv_nw = jax.lax.rsqrt(w_[0] * w_[0] + w_[1] * w_[1] + w_[2] * w_[2] + EPS)
    u2 = [w_[d] * inv_nw for d in range(3)]
    u3 = [u1[1] * u2[2] - u1[2] * u2[1],
          u1[2] * u2[0] - u1[0] * u2[2],
          u1[0] * u2[1] - u1[1] * u2[0]]
    rows = (u1, u2, u3)                              # rot[b,i,j] = rows[i][j][b,0]

    # --- rotate coords into the learned frame: xr_i = sum_j rot[.,i,j]*x_j ---
    # (f32 row coeffs * bf16 x promotes to f32; cast back to bf16 for the MXU)
    xr = [(rows[i][0] * x3[0] + rows[i][1] * x3[1] + rows[i][2] * x3[2]).astype(bf16)
          for i in range(3)]                                    # 3 x (TB, N) bf16

    # --- embedding head (one matmul, M = 3*TB) + L2 norm over the 3-vector ---
    e = jnp.dot(jnp.concatenate(xr, axis=0), we_ref[...],
                preferred_element_type=f32)                     # (3*TB, F)
    e3 = e.reshape(3, tb, fdim)
    feat_ref[...] = jnp.sqrt(e3[0] * e3[0] + e3[1] * e3[1] + e3[2] * e3[2])

    # --- rotation, row-major flattened, one lane-concat + one store ---
    rot_ref[...] = jnp.concatenate(
        [rows[i][j] for i in range(3) for j in range(3)], axis=1)


# ------------------------------ plain-JAX glue -------------------------------

def _rup(v, m):
    return ((v + m - 1) // m) * m


def _batch_tile(B):
    """Pick the batch tile TB (multiple of 16) and padded batch Bp.

    Tiny batches run as one grid step; otherwise the grid is kept even so
    dimension_semantics=("parallel",) shards across v7x's two TensorCores,
    with ~256-512-row tiles for large B to amortize per-step overhead."""
    if B <= 16:
        tb = _rup(B, 16)
        return tb, tb
    steps = max(2, _rup(-(-B // 512), 2))      # even grid, ~<=512 rows/tile
    tb = _rup(-(-B // steps), 16)
    return tb, steps * tb


def _pad_to(w, rows, cols):
    r, c = w.shape
    if r == rows and c == cols:
        return w
    return jnp.pad(w, ((0, rows - r), (0, cols - c)))


def init_params(key, num_points, num_features):
    """Deterministic torch-nn.Linear-style init. Weights stored transposed
    (in, out) so the kernel can do x @ W directly."""
    n, n2, n4, f = num_points, num_points // 2, num_points // 4, num_features
    ks = jax.random.split(key, 6)

    def lin(k, fan_in, fan_out):
        bound = 1.0 / float(fan_in) ** 0.5
        return jax.random.uniform(k, (fan_in, fan_out), jnp.float32, -bound, bound)

    return {
        "w1f": lin(ks[0], n, n2), "w1d": lin(ks[1], n, n2),    # VNLinearLeakyReLU #1
        "w2f": lin(ks[2], n2, n4), "w2d": lin(ks[3], n2, n4),  # VNLinearLeakyReLU #2
        "w3": lin(ks[4], n4, 3),                               # VNLinear(n//4, 3)
        "we": lin(ks[5], n, f),                                # embedding_head VNLinear
    }


@functools.partial(jax.jit, static_argnames=("get_rotation",))
def equiv_transformer_forward(x, params, get_rotation=False):
    # encoder with dim_feat == 0 modeled as identity:
    coors = x.astype(jnp.float32)                              # (B, N, 3)
    B, N, _ = coors.shape
    F = params["we"].shape[1]
    TB, Bp = _batch_tile(B)

    bf16 = jnp.bfloat16
    # transpose + bf16 cast + pad fused into one XLA pass; bf16 halves the
    # dominant HBM stream into the kernel. Zero-pad rows are inert downstream.
    xg = jnp.transpose(coors, (2, 0, 1)).astype(bf16)          # (3, B, N)
    if Bp != B:
        xg = jnp.pad(xg, ((0, 0), (0, Bp - B), (0, 0)))

    n2 = params["w1f"].shape[1]
    n4 = params["w2f"].shape[1]
    n2p = _rup(n2, 128)                                        # lane-aligned splits
    n4p = _rup(n4, 128)
    w1 = jnp.concatenate([_pad_to(params["w1f"], N, n2p),
                          _pad_to(params["w1d"], N, n2p)], axis=1).astype(bf16)
    w2 = jnp.concatenate([_pad_to(params["w2f"], n2p, n4p),
                          _pad_to(params["w2d"], n2p, n4p)], axis=1).astype(bf16)
    w3 = _pad_to(params["w3"], n4p, 3).astype(jnp.float32)     # keep f32 (tiny)
    we = params["we"].astype(bf16)

    grid_spec = pltpu.PrefetchScalarGridSpec(
        num_scalar_prefetch=0,
        grid=(Bp // TB,),
        in_specs=[
            pl.BlockSpec((3, TB, N), lambda b: (0, b, 0)),
            pl.BlockSpec(w1.shape, lambda b: (0, 0)),
            pl.BlockSpec(w2.shape, lambda b: (0, 0)),
            pl.BlockSpec(w3.shape, lambda b: (0, 0)),
            pl.BlockSpec(we.shape, lambda b: (0, 0)),
        ],
        out_specs=[
            pl.BlockSpec((TB, F), lambda b: (b, 0)),
            pl.BlockSpec((TB, 9), lambda b: (b, 0)),
        ],
    )
    feat, rot_flat = pl.pallas_call(
        fused_equiv_kernel,
        out_shape=(jax.ShapeDtypeStruct((Bp, F), jnp.float32),
                   jax.ShapeDtypeStruct((Bp, 9), jnp.float32)),
        grid_spec=grid_spec,
        compiler_params=pltpu.CompilerParams(dimension_semantics=("parallel",)),
    )(xg, w1, w2, w3, we)

    out = {"pcloud": feat[:B]}                                 # (B, F)
    if get_rotation:
        rot = rot_flat[:B].reshape(B, 3, 3)                    # rows = (u1, u2, u3)
        out["rotation"] = jnp.swapaxes(rot, -1, -2)            # rot.mT
    return out


# --------------------------- pure-JAX reference ------------------------------

def _ref_vn_linear(x, wT):
    # x: (B, Cin, 3); wT: (Cin, Cout)  == torch VNLinear over the channel dim
    return jnp.einsum("bcd,co->bod", x, wT, precision=jax.lax.Precision.HIGHEST)


def _ref_vn_leaky(x, wfT, wdT):
    p = _ref_vn_linear(x, wfT)
    d = _ref_vn_linear(x, wdT)
    dot = jnp.sum(p * d, axis=2, keepdims=True)
    dsq = jnp.sum(d * d, axis=2, keepdims=True)
    proj = p - (dot / (dsq + EPS)) * d
    return NEG_SLOPE * p + (1.0 - NEG_SLOPE) * jnp.where(dot >= 0.0, p, proj)


def gram_schmidt(z, eps=EPS):
    v1, v2 = z[:, 0, :], z[:, 1, :]
    u1 = v1 / (jnp.linalg.norm(v1, axis=-1, keepdims=True) + eps)
    v2 = v2 - jnp.sum(v2 * u1, axis=-1, keepdims=True) * u1
    u2 = v2 / (jnp.linalg.norm(v2, axis=-1, keepdims=True) + eps)
    u3 = jnp.cross(u1, u2)
    return jnp.stack([u1, u2, u3], axis=1)                     # (B, 3, 3)


def reference_forward(x, params):
    coors = x
    h1 = _ref_vn_leaky(coors, params["w1f"], params["w1d"])
    h2 = _ref_vn_leaky(h1, params["w2f"], params["w2d"])
    z = _ref_vn_linear(h2, params["w3"])                       # (B, 3, 3)
    rot = gram_schmidt(z)
    x_rot = jnp.einsum("bij,bnj->bni", rot, coors,
                       precision=jax.lax.Precision.HIGHEST)
    emb = _ref_vn_linear(x_rot, params["we"])                  # (B, F, 3)
    return {"pcloud": jnp.linalg.norm(emb, axis=-1),
            "rotation": jnp.swapaxes(rot, -1, -2)}


# ---------------------------------- main -------------------------------------

if __name__ == "__main__":
    B, NUM_POINTS, NUM_FEATURES = 2, 256, 128
    key = jax.random.PRNGKey(0)
    kx, kp = jax.random.split(key)

    x = jax.random.normal(kx, (B, NUM_POINTS, 3), jnp.float32)  # point cloud
    params = init_params(kp, NUM_POINTS, NUM_FEATURES)

    out = equiv_transformer_forward(x, params, get_rotation=True)
    out = jax.tree_util.tree_map(jax.block_until_ready, out)

    ref = reference_forward(x, params)
    assert out["pcloud"].shape == (B, NUM_FEATURES)
    assert out["rotation"].shape == (B, 3, 3)

    # pcloud is insensitive to the frame itself (the learned frame is
    # orthonormal by construction), so bf16 MXU operands keep it tight.
    assert jnp.allclose(out["pcloud"], ref["pcloud"], rtol=2e-2, atol=2e-2)

    # Rotation entries see bf16 operand rounding through the VN MLP (w3 head
    # stays f32): check orthonormality tightly, entries looser.
    R = out["rotation"]
    eye = jnp.broadcast_to(jnp.eye(3, dtype=jnp.float32), (B, 3, 3))
    assert jnp.allclose(jnp.einsum("bij,bkj->bik", R, R), eye, atol=1e-3)
    assert jnp.allclose(R, ref["rotation"], rtol=5e-2, atol=5e-2)

    print("KERNEL_OK")
</pallas_src>

<mosaic_0001>
module attributes {stable_mosaic.version = 11 : i64} {
  func.func @fused_equiv_kernel(%arg0: i32, %arg1: memref<3x16x256xbf16, #tpu.memory_space<vmem>>, %arg2: memref<256x256xbf16, #tpu.memory_space<vmem>>, %arg3: memref<128x256xbf16, #tpu.memory_space<vmem>>, %arg4: memref<128x3xf32, #tpu.memory_space<vmem>>, %arg5: memref<256x128xbf16, #tpu.memory_space<vmem>>, %arg6: memref<16x128xf32, #tpu.memory_space<vmem>>, %arg7: memref<16x9xf32, #tpu.memory_space<vmem>>) attributes {dimension_semantics = [#tpu.dimension_semantics<parallel>], iteration_bounds = array<i64: 1>, scalar_prefetch = 0 : i64, scratch_operands = 0 : i64, tpu.core_type = #tpu.core_type<tc>, window_params = [{transform_indices = @transform_0, window_bounds = array<i64: 3, 16, 256>}, {pipeline_mode = #tpu.pipeline_mode<synchronous>, transform_indices = @transform_1, window_bounds = array<i64: 256, 256>}, {pipeline_mode = #tpu.pipeline_mode<synchronous>, transform_indices = @transform_2, window_bounds = array<i64: 128, 256>}, {pipeline_mode = #tpu.pipeline_mode<synchronous>, transform_indices = @transform_3, window_bounds = array<i64: 128, 3>}, {pipeline_mode = #tpu.pipeline_mode<synchronous>, transform_indices = @transform_4, window_bounds = array<i64: 256, 128>}, {transform_indices = @transform_5, window_bounds = array<i64: 16, 128>}, {transform_indices = @transform_6, window_bounds = array<i64: 16, 9>}]} {
    %c0 = arith.constant 0 : index
    %c0_0 = arith.constant 0 : index
    %c0_1 = arith.constant 0 : index
    %0 = vector.load %arg1[%c0, %c0_0, %c0_1] : memref<3x16x256xbf16, #tpu.memory_space<vmem>>, vector<3x16x256xbf16>
    %1 = vector.shape_cast %0 : vector<3x16x256xbf16> to vector<48x256xbf16>
    %c0_2 = arith.constant 0 : index
    %c0_3 = arith.constant 0 : index
    %2 = vector.load %arg2[%c0_2, %c0_3] : memref<256x256xbf16, #tpu.memory_space<vmem>>, vector<256x256xbf16>
    %cst = arith.constant dense<0.000000e+00> : vector<48x256xf32>
    %3 = tpu.matmul %1, %2, %cst {dimension_numbers = #tpu.dot_dimension_numbers<[1], [0], [0], [1], [0, 0, 1, 1], [], []>} : vector<48x256xbf16>, vector<256x256xbf16>, vector<48x256xf32> -> vector<48x256xf32>
    %4 = vector.extract_strided_slice %3 {offsets = [0, 0], sizes = [48, 128], strides = [1, 1]} : vector<48x256xf32> to vector<48x128xf32>
    %5 = vector.shape_cast %4 : vector<48x128xf32> to vector<3x16x128xf32>
    %6 = vector.extract_strided_slice %3 {offsets = [0, 128], sizes = [48, 128], strides = [1, 1]} : vector<48x256xf32> to vector<48x128xf32>
    %7 = vector.shape_cast %6 : vector<48x128xf32> to vector<3x16x128xf32>
    %8 = vector.extract_strided_slice %5 {offsets = [0, 0, 0], sizes = [1, 16, 128], strides = [1, 1, 1]} : vector<3x16x128xf32> to vector<1x16x128xf32>
    %9 = vector.shape_cast %8 : vector<1x16x128xf32> to vector<16x128xf32>
    %10 = vector.extract_strided_slice %7 {offsets = [0, 0, 0], sizes = [1, 16, 128], strides = [1, 1, 1]} : vector<3x16x128xf32> to vector<1x16x128xf32>
    %11 = vector.shape_cast %10 : vector<1x16x128xf32> to vector<16x128xf32>
    %12 = arith.mulf %9, %11 : vector<16x128xf32>
    %13 = vector.extract_strided_slice %5 {offsets = [1, 0, 0], sizes = [1, 16, 128], strides = [1, 1, 1]} : vector<3x16x128xf32> to vector<1x16x128xf32>
    %14 = vector.shape_cast %13 : vector<1x16x128xf32> to vector<16x128xf32>
    %15 = vector.extract_strided_slice %7 {offsets = [1, 0, 0], sizes = [1, 16, 128], strides = [1, 1, 1]} : vector<3x16x128xf32> to vector<1x16x128xf32>
    %16 = vector.shape_cast %15 : vector<1x16x128xf32> to vector<16x128xf32>
    %17 = arith.mulf %14, %16 : vector<16x128xf32>
    %18 = arith.addf %12, %17 : vector<16x128xf32>
    %19 = vector.extract_strided_slice %5 {offsets = [2, 0, 0], sizes = [1, 16, 128], strides = [1, 1, 1]} : vector<3x16x128xf32> to vector<1x16x128xf32>
    %20 = vector.shape_cast %19 : vector<1x16x128xf32> to vector<16x128xf32>
    %21 = vector.extract_strided_slice %7 {offsets = [2, 0, 0], sizes = [1, 16, 128], strides = [1, 1, 1]} : vector<3x16x128xf32> to vector<1x16x128xf32>
    %22 = vector.shape_cast %21 : vector<1x16x128xf32> to vector<16x128xf32>
    %23 = arith.mulf %20, %22 : vector<16x128xf32>
    %24 = arith.addf %18, %23 : vector<16x128xf32>
    %25 = vector.extract_strided_slice %7 {offsets = [0, 0, 0], sizes = [1, 16, 128], strides = [1, 1, 1]} : vector<3x16x128xf32> to vector<1x16x128xf32>
    %26 = vector.shape_cast %25 : vector<1x16x128xf32> to vector<16x128xf32>
    %27 = vector.extract_strided_slice %7 {offsets = [0, 0, 0], sizes = [1, 16, 128], strides = [1, 1, 1]} : vector<3x16x128xf32> to vector<1x16x128xf32>
    %28 = vector.shape_cast %27 : vector<1x16x128xf32> to vector<16x128xf32>
    %29 = arith.mulf %26, %28 : vector<16x128xf32>
    %30 = vector.extract_strided_slice %7 {offsets = [1, 0, 0], sizes = [1, 16, 128], strides = [1, 1, 1]} : vector<3x16x128xf32> to vector<1x16x128xf32>
    %31 = vector.shape_cast %30 : vector<1x16x128xf32> to vector<16x128xf32>
    %32 = vector.extract_strided_slice %7 {offsets = [1, 0, 0], sizes = [1, 16, 128], strides = [1, 1, 1]} : vector<3x16x128xf32> to vector<1x16x128xf32>
    %33 = vector.shape_cast %32 : vector<1x16x128xf32> to vector<16x128xf32>
    %34 = arith.mulf %31, %33 : vector<16x128xf32>
    %35 = arith.addf %29, %34 : vector<16x128xf32>
    %36 = vector.extract_strided_slice %7 {offsets = [2, 0, 0], sizes = [1, 16, 128], strides = [1, 1, 1]} : vector<3x16x128xf32> to vector<1x16x128xf32>
    %37 = vector.shape_cast %36 : vector<1x16x128xf32> to vector<16x128xf32>
    %38 = vector.extract_strided_slice %7 {offsets = [2, 0, 0], sizes = [1, 16, 128], strides = [1, 1, 1]} : vector<3x16x128xf32> to vector<1x16x128xf32>
    %39 = vector.shape_cast %38 : vector<1x16x128xf32> to vector<16x128xf32>
    %40 = arith.mulf %37, %39 : vector<16x128xf32>
    %41 = arith.addf %35, %40 : vector<16x128xf32>
    %cst_4 = arith.constant 0.000000e+00 : f32
    %42 = vector.broadcast %cst_4 : f32 to vector<16x128xf32>
    %43 = arith.minimumf %24, %42 : vector<16x128xf32>
    %cst_5 = arith.constant 8.000000e-01 : f32
    %44 = vector.broadcast %cst_5 : f32 to vector<16x128xf32>
    %45 = arith.mulf %44, %43 : vector<16x128xf32>
    %cst_6 = arith.constant 9.99999997E-7 : f32
    %46 = vector.broadcast %cst_6 : f32 to vector<16x128xf32>
    %47 = arith.addf %41, %46 : vector<16x128xf32>
    %48 = tpu.reciprocal %47 {approx = true} : vector<16x128xf32> -> vector<16x128xf32>
    %49 = arith.mulf %45, %48 : vector<16x128xf32>
    %50 = vector.shape_cast %49 : vector<16x128xf32> to vector<1x16x128xf32>
    %51 = vector.broadcast %50 : vector<1x16x128xf32> to vector<3x16x128xf32>
    %52 = arith.mulf %51, %7 : vector<3x16x128xf32>
    %53 = arith.subf %5, %52 : vector<3x16x128xf32>
    %54 = vector.shape_cast %53 : vector<3x16x128xf32> to vector<48x128xf32>
    %55 = arith.truncf %54 : vector<48x128xf32> to vector<48x128xbf16>
    %c0_7 = arith.constant 0 : index
    %c0_8 = arith.constant 0 : index
    %56 = vector.load %arg3[%c0_7, %c0_8] : memref<128x256xbf16, #tpu.memory_space<vmem>>, vector<128x256xbf16>
    %cst_9 = arith.constant dense<0.000000e+00> : vector<48x256xf32>
    %57 = tpu.matmul %55, %56, %cst_9 {dimension_numbers = #tpu.dot_dimension_numbers<[1], [0], [0], [1], [0, 0, 1, 1], [], []>} : vector<48x128xbf16>, vector<128x256xbf16>, vector<48x256xf32> -> vector<48x256xf32>
    %58 = vector.extract_strided_slice %57 {offsets = [0, 0], sizes = [48, 128], strides = [1, 1]} : vector<48x256xf32> to vector<48x128xf32>
    %59 = vector.shape_cast %58 : vector<48x128xf32> to vector<3x16x128xf32>
    %60 = vector.extract_strided_slice %57 {offsets = [0, 128], sizes = [48, 128], strides = [1, 1]} : vector<48x256xf32> to vector<48x128xf32>
    %61 = vector.shape_cast %60 : vector<48x128xf32> to vector<3x16x128xf32>
    %62 = vector.extract_strided_slice %59 {offsets = [0, 0, 0], sizes = [1, 16, 128], strides = [1, 1, 1]} : vector<3x16x128xf32> to vector<1x16x128xf32>
    %63 = vector.shape_cast %62 : vector<1x16x128xf32> to vector<16x128xf32>
    %64 = vector.extract_strided_slice %61 {offsets = [0, 0, 0], sizes = [1, 16, 128], strides = [1, 1, 1]} : vector<3x16x128xf32> to vector<1x16x128xf32>
    %65 = vector.shape_cast %64 : vector<1x16x128xf32> to vector<16x128xf32>
    %66 = arith.mulf %63, %65 : vector<16x128xf32>
    %67 = vector.extract_strided_slice %59 {offsets = [1, 0, 0], sizes = [1, 16, 128], strides = [1, 1, 1]} : vector<3x16x128xf32> to vector<1x16x128xf32>
    %68 = vector.shape_cast %67 : vector<1x16x128xf32> to vector<16x128xf32>
    %69 = vector.extract_strided_slice %61 {offsets = [1, 0, 0], sizes = [1, 16, 128], strides = [1, 1, 1]} : vector<3x16x128xf32> to vector<1x16x128xf32>
    %70 = vector.shape_cast %69 : vector<1x16x128xf32> to vector<16x128xf32>
    %71 = arith.mulf %68, %70 : vector<16x128xf32>
    %72 = arith.addf %66, %71 : vector<16x128xf32>
    %73 = vector.extract_strided_slice %59 {offsets = [2, 0, 0], sizes = [1, 16, 128], strides = [1, 1, 1]} : vector<3x16x128xf32> to vector<1x16x128xf32>
    %74 = vector.shape_cast %73 : vector<1x16x128xf32> to vector<16x128xf32>
    %75 = vector.extract_strided_slice %61 {offsets = [2, 0, 0], sizes = [1, 16, 128], strides = [1, 1, 1]} : vector<3x16x128xf32> to vector<1x16x128xf32>
    %76 = vector.shape_cast %75 : vector<1x16x128xf32> to vector<16x128xf32>
    %77 = arith.mulf %74, %76 : vector<16x128xf32>
    %78 = arith.addf %72, %77 : vector<16x128xf32>
    %79 = vector.extract_strided_slice %61 {offsets = [0, 0, 0], sizes = [1, 16, 128], strides = [1, 1, 1]} : vector<3x16x128xf32> to vector<1x16x128xf32>
    %80 = vector.shape_cast %79 : vector<1x16x128xf32> to vector<16x128xf32>
    %81 = vector.extract_strided_slice %61 {offsets = [0, 0, 0], sizes = [1, 16, 128], strides = [1, 1, 1]} : vector<3x16x128xf32> to vector<1x16x128xf32>
    %82 = vector.shape_cast %81 : vector<1x16x128xf32> to vector<16x128xf32>
    %83 = arith.mulf %80, %82 : vector<16x128xf32>
    %84 = vector.extract_strided_slice %61 {offsets = [1, 0, 0], sizes = [1, 16, 128], strides = [1, 1, 1]} : vector<3x16x128xf32> to vector<1x16x128xf32>
    %85 = vector.shape_cast %84 : vector<1x16x128xf32> to vector<16x128xf32>
    %86 = vector.extract_strided_slice %61 {offsets = [1, 0, 0], sizes = [1, 16, 128], strides = [1, 1, 1]} : vector<3x16x128xf32> to vector<1x16x128xf32>
    %87 = vector.shape_cast %86 : vector<1x16x128xf32> to vector<16x128xf32>
    %88 = arith.mulf %85, %87 : vector<16x128xf32>
    %89 = arith.addf %83, %88 : vector<16x128xf32>
    %90 = vector.extract_strided_slice %61 {offsets = [2, 0, 0], sizes = [1, 16, 128], strides = [1, 1, 1]} : vector<3x16x128xf32> to vector<1x16x128xf32>
    %91 = vector.shape_cast %90 : vector<1x16x128xf32> to vector<16x128xf32>
    %92 = vector.extract_strided_slice %61 {offsets = [2, 0, 0], sizes = [1, 16, 128], strides = [1, 1, 1]} : vector<3x16x128xf32> to vector<1x16x128xf32>
    %93 = vector.shape_cast %92 : vector<1x16x128xf32> to vector<16x128xf32>
    %94 = arith.mulf %91, %93 : vector<16x128xf32>
    %95 = arith.addf %89, %94 : vector<16x128xf32>
    %cst_10 = arith.constant 0.000000e+00 : f32
    %96 = vector.broadcast %cst_10 : f32 to vector<16x128xf32>
    %97 = arith.minimumf %78, %96 : vector<16x128xf32>
    %cst_11 = arith.constant 8.000000e-01 : f32
    %98 = vector.broadcast %cst_11 : f32 to vector<16x128xf32>
    %99 = arith.mulf %98, %97 : vector<16x128xf32>
    %cst_12 = arith.constant 9.99999997E-7 : f32
    %100 = vector.broadcast %cst_12 : f32 to vector<16x128xf32>
    %101 = arith.addf %95, %100 : vector<16x128xf32>
    %102 = tpu.reciprocal %101 {approx = true} : vector<16x128xf32> -> vector<16x128xf32>
    %103 = arith.mulf %99, %102 : vector<16x128xf32>
    %104 = vector.shape_cast %103 : vector<16x128xf32> to vector<1x16x128xf32>
    %105 = vector.broadcast %104 : vector<1x16x128xf32> to vector<3x16x128xf32>
    %106 = arith.mulf %105, %61 : vector<3x16x128xf32>
    %107 = arith.subf %59, %106 : vector<3x16x128xf32>
    %108 = vector.shape_cast %107 : vector<3x16x128xf32> to vector<48x128xf32>
    %c0_13 = arith.constant 0 : index
    %c0_14 = arith.constant 0 : index
    %109 = vector.load %arg4[%c0_13, %c0_14] : memref<128x3xf32, #tpu.memory_space<vmem>>, vector<128x3xf32>
    %cst_15 = arith.constant dense<0.000000e+00> : vector<48x3xf32>
    %110 = tpu.matmul %108, %109, %cst_15 {dimension_numbers = #tpu.dot_dimension_numbers<[1], [0], [0], [1], [0, 0, 1, 1], [], []>} : vector<48x128xf32>, vector<128x3xf32>, vector<48x3xf32> -> vector<48x3xf32>
    %111 = vector.shape_cast %110 : vector<48x3xf32> to vector<3x16x3xf32>
    %112 = vector.extract_strided_slice %111 {offsets = [0, 0, 0], sizes = [1, 16, 1], strides = [1, 1, 1]} : vector<3x16x3xf32> to vector<1x16x1xf32>
    %113 = vector.shape_cast %112 : vector<1x16x1xf32> to vector<16x1xf32>
    %114 = vector.extract_strided_slice %111 {offsets = [1, 0, 0], sizes = [1, 16, 1], strides = [1, 1, 1]} : vector<3x16x3xf32> to vector<1x16x1xf32>
    %115 = vector.shape_cast %114 : vector<1x16x1xf32> to vector<16x1xf32>
    %116 = vector.extract_strided_slice %111 {offsets = [2, 0, 0], sizes = [1, 16, 1], strides = [1, 1, 1]} : vector<3x16x3xf32> to vector<1x16x1xf32>
    %117 = vector.shape_cast %116 : vector<1x16x1xf32> to vector<16x1xf32>
    %118 = vector.extract_strided_slice %111 {offsets = [0, 0, 1], sizes = [1, 16, 1], strides = [1, 1, 1]} : vector<3x16x3xf32> to vector<1x16x1xf32>
    %119 = vector.shape_cast %118 : vector<1x16x1xf32> to vector<16x1xf32>
    %120 = vector.extract_strided_slice %111 {offsets = [1, 0, 1], sizes = [1, 16, 1], strides = [1, 1, 1]} : vector<3x16x3xf32> to vector<1x16x1xf32>
    %121 = vector.shape_cast %120 : vector<1x16x1xf32> to vector<16x1xf32>
    %122 = vector.extract_strided_slice %111 {offsets = [2, 0, 1], sizes = [1, 16, 1], strides = [1, 1, 1]} : vector<3x16x3xf32> to vector<1x16x1xf32>
    %123 = vector.shape_cast %122 : vector<1x16x1xf32> to vector<16x1xf32>
    %124 = arith.mulf %113, %113 : vector<16x1xf32>
    %125 = arith.mulf %115, %115 : vector<16x1xf32>
    %126 = arith.addf %124, %125 : vector<16x1xf32>
    %127 = arith.mulf %117, %117 : vector<16x1xf32>
    %128 = arith.addf %126, %127 : vector<16x1xf32>
    %cst_16 = arith.constant 9.99999997E-7 : f32
    %129 = vector.broadcast %cst_16 : f32 to vector<16x1xf32>
    %130 = arith.addf %128, %129 : vector<16x1xf32>
    %131 = math.rsqrt %130 : vector<16x1xf32>
    %132 = arith.mulf %113, %131 : vector<16x1xf32>
    %133 = arith.mulf %115, %131 : vector<16x1xf32>
    %134 = arith.mulf %117, %131 : vector<16x1xf32>
    %135 = arith.mulf %119, %132 : vector<16x1xf32>
    %136 = arith.mulf %121, %133 : vector<16x1xf32>
    %137 = arith.addf %135, %136 : vector<16x1xf32>
    %138 = arith.mulf %123, %134 : vector<16x1xf32>
    %139 = arith.addf %137, %138 : vector<16x1xf32>
    %140 = arith.mulf %139, %132 : vector<16x1xf32>
    %141 = arith.subf %119, %140 : vector<16x1xf32>
    %142 = arith.mulf %139, %133 : vector<16x1xf32>
    %143 = arith.subf %121, %142 : vector<16x1xf32>
    %144 = arith.mulf %139, %134 : vector<16x1xf32>
    %145 = arith.subf %123, %144 : vector<16x1xf32>
    %146 = arith.mulf %141, %141 : vector<16x1xf32>
    %147 = arith.mulf %143, %143 : vector<16x1xf32>
    %148 = arith.addf %146, %147 : vector<16x1xf32>
    %149 = arith.mulf %145, %145 : vector<16x1xf32>
    %150 = arith.addf %148, %149 : vector<16x1xf32>
    %cst_17 = arith.constant 9.99999997E-7 : f32
    %151 = vector.broadcast %cst_17 : f32 to vector<16x1xf32>
    %152 = arith.addf %150, %151 : vector<16x1xf32>
    %153 = math.rsqrt %152 : vector<16x1xf32>
    %154 = arith.mulf %141, %153 : vector<16x1xf32>
    %155 = arith.mulf %143, %153 : vector<16x1xf32>
    %156 = arith.mulf %145, %153 : vector<16x1xf32>
    %157 = arith.mulf %133, %156 : vector<16x1xf32>
    %158 = arith.mulf %134, %155 : vector<16x1xf32>
    %159 = arith.subf %157, %158 : vector<16x1xf32>
    %160 = arith.mulf %134, %154 : vector<16x1xf32>
    %161 = arith.mulf %132, %156 : vector<16x1xf32>
    %162 = arith.subf %160, %161 : vector<16x1xf32>
    %163 = arith.mulf %132, %155 : vector<16x1xf32>
    %164 = arith.mulf %133, %154 : vector<16x1xf32>
    %165 = arith.subf %163, %164 : vector<16x1xf32>
    %166 = vector.extract_strided_slice %0 {offsets = [0, 0, 0], sizes = [1, 16, 256], strides = [1, 1, 1]} : vector<3x16x256xbf16> to vector<1x16x256xbf16>
    %167 = vector.shape_cast %166 : vector<1x16x256xbf16> to vector<16x256xbf16>
    %168 = arith.extf %167 : vector<16x256xbf16> to vector<16x256xf32>
    %169 = vector.broadcast %132 : vector<16x1xf32> to vector<16x256xf32>
    %170 = arith.mulf %169, %168 : vector<16x256xf32>
    %171 = vector.extract_strided_slice %0 {offsets = [1, 0, 0], sizes = [1, 16, 256], strides = [1, 1, 1]} : vector<3x16x256xbf16> to vector<1x16x256xbf16>
    %172 = vector.shape_cast %171 : vector<1x16x256xbf16> to vector<16x256xbf16>
    %173 = arith.extf %172 : vector<16x256xbf16> to vector<16x256xf32>
    %174 = vector.broadcast %133 : vector<16x1xf32> to vector<16x256xf32>
    %175 = arith.mulf %174, %173 : vector<16x256xf32>
    %176 = arith.addf %170, %175 : vector<16x256xf32>
    %177 = vector.extract_strided_slice %0 {offsets = [2, 0, 0], sizes = [1, 16, 256], strides = [1, 1, 1]} : vector<3x16x256xbf16> to vector<1x16x256xbf16>
    %178 = vector.shape_cast %177 : vector<1x16x256xbf16> to vector<16x256xbf16>
    %179 = arith.extf %178 : vector<16x256xbf16> to vector<16x256xf32>
    %180 = vector.broadcast %134 : vector<16x1xf32> to vector<16x256xf32>
    %181 = arith.mulf %180, %179 : vector<16x256xf32>
    %182 = arith.addf %176, %181 : vector<16x256xf32>
    %183 = arith.truncf %182 : vector<16x256xf32> to vector<16x256xbf16>
    %184 = vector.extract_strided_slice %0 {offsets = [0, 0, 0], sizes = [1, 16, 256], strides = [1, 1, 1]} : vector<3x16x256xbf16> to vector<1x16x256xbf16>
    %185 = vector.shape_cast %184 : vector<1x16x256xbf16> to vector<16x256xbf16>
    %186 = arith.extf %185 : vector<16x256xbf16> to vector<16x256xf32>
    %187 = vector.broadcast %154 : vector<16x1xf32> to vector<16x256xf32>
    %188 = arith.mulf %187, %186 : vector<16x256xf32>
    %189 = vector.extract_strided_slice %0 {offsets = [1, 0, 0], sizes = [1, 16, 256], strides = [1, 1, 1]} : vector<3x16x256xbf16> to vector<1x16x256xbf16>
    %190 = vector.shape_cast %189 : vector<1x16x256xbf16> to vector<16x256xbf16>
    %191 = arith.extf %190 : vector<16x256xbf16> to vector<16x256xf32>
    %192 = vector.broadcast %155 : vector<16x1xf32> to vector<16x256xf32>
    %193 = arith.mulf %192, %191 : vector<16x256xf32>
    %194 = arith.addf %188, %193 : vector<16x256xf32>
    %195 = vector.extract_strided_slice %0 {offsets = [2, 0, 0], sizes = [1, 16, 256], strides = [1, 1, 1]} : vector<3x16x256xbf16> to vector<1x16x256xbf16>
    %196 = vector.shape_cast %195 : vector<1x16x256xbf16> to vector<16x256xbf16>
    %197 = arith.extf %196 : vector<16x256xbf16> to vector<16x256xf32>
    %198 = vector.broadcast %156 : vector<16x1xf32> to vector<16x256xf32>
    %199 = arith.mulf %198, %197 : vector<16x256xf32>
    %200 = arith.addf %194, %199 : vector<16x256xf32>
    %201 = arith.truncf %200 : vector<16x256xf32> to vector<16x256xbf16>
    %202 = vector.extract_strided_slice %0 {offsets = [0, 0, 0], sizes = [1, 16, 256], strides = [1, 1, 1]} : vector<3x16x256xbf16> to vector<1x16x256xbf16>
    %203 = vector.shape_cast %202 : vector<1x16x256xbf16> to vector<16x256xbf16>
    %204 = arith.extf %203 : vector<16x256xbf16> to vector<16x256xf32>
    %205 = vector.broadcast %159 : vector<16x1xf32> to vector<16x256xf32>
    %206 = arith.mulf %205, %204 : vector<16x256xf32>
    %207 = vector.extract_strided_slice %0 {offsets = [1, 0, 0], sizes = [1, 16, 256], strides = [1, 1, 1]} : vector<3x16x256xbf16> to vector<1x16x256xbf16>
    %208 = vector.shape_cast %207 : vector<1x16x256xbf16> to vector<16x256xbf16>
    %209 = arith.extf %208 : vector<16x256xbf16> to vector<16x256xf32>
    %210 = vector.broadcast %162 : vector<16x1xf32> to vector<16x256xf32>
    %211 = arith.mulf %210, %209 : vector<16x256xf32>
    %212 = arith.addf %206, %211 : vector<16x256xf32>
    %213 = vector.extract_strided_slice %0 {offsets = [2, 0, 0], sizes = [1, 16, 256], strides = [1, 1, 1]} : vector<3x16x256xbf16> to vector<1x16x256xbf16>
    %214 = vector.shape_cast %213 : vector<1x16x256xbf16> to vector<16x256xbf16>
    %215 = arith.extf %214 : vector<16x256xbf16> to vector<16x256xf32>
    %216 = vector.broadcast %165 : vector<16x1xf32> to vector<16x256xf32>
    %217 = arith.mulf %216, %215 : vector<16x256xf32>
    %218 = arith.addf %212, %217 : vector<16x256xf32>
    %219 = arith.truncf %218 : vector<16x256xf32> to vector<16x256xbf16>
    %220 = tpu.concatenate %183, %201, %219 in 0 : vector<16x256xbf16>, vector<16x256xbf16>, vector<16x256xbf16> -> vector<48x256xbf16>
    %c0_18 = arith.constant 0 : index
    %c0_19 = arith.constant 0 : index
    %221 = vector.load %arg5[%c0_18, %c0_19] : memref<256x128xbf16, #tpu.memory_space<vmem>>, vector<256x128xbf16>
    %cst_20 = arith.constant dense<0.000000e+00> : vector<48x128xf32>
    %222 = tpu.matmul %220, %221, %cst_20 {dimension_numbers = #tpu.dot_dimension_numbers<[1], [0], [0], [1], [0, 0, 1, 1], [], []>} : vector<48x256xbf16>, vector<256x128xbf16>, vector<48x128xf32> -> vector<48x128xf32>
    %223 = vector.shape_cast %222 : vector<48x128xf32> to vector<3x16x128xf32>
    %224 = vector.extract_strided_slice %223 {offsets = [0, 0, 0], sizes = [1, 16, 128], strides = [1, 1, 1]} : vector<3x16x128xf32> to vector<1x16x128xf32>
    %225 = vector.shape_cast %224 : vector<1x16x128xf32> to vector<16x128xf32>
    %226 = vector.extract_strided_slice %223 {offsets = [0, 0, 0], sizes = [1, 16, 128], strides = [1, 1, 1]} : vector<3x16x128xf32> to vector<1x16x128xf32>
    %227 = vector.shape_cast %226 : vector<1x16x128xf32> to vector<16x128xf32>
    %228 = arith.mulf %225, %227 : vector<16x128xf32>
    %229 = vector.extract_strided_slice %223 {offsets = [1, 0, 0], sizes = [1, 16, 128], strides = [1, 1, 1]} : vector<3x16x128xf32> to vector<1x16x128xf32>
    %230 = vector.shape_cast %229 : vector<1x16x128xf32> to vector<16x128xf32>
    %231 = vector.extract_strided_slice %223 {offsets = [1, 0, 0], sizes = [1, 16, 128], strides = [1, 1, 1]} : vector<3x16x128xf32> to vector<1x16x128xf32>
    %232 = vector.shape_cast %231 : vector<1x16x128xf32> to vector<16x128xf32>
    %233 = arith.mulf %230, %232 : vector<16x128xf32>
    %234 = arith.addf %228, %233 : vector<16x128xf32>
    %235 = vector.extract_strided_slice %223 {offsets = [2, 0, 0], sizes = [1, 16, 128], strides = [1, 1, 1]} : vector<3x16x128xf32> to vector<1x16x128xf32>
    %236 = vector.shape_cast %235 : vector<1x16x128xf32> to vector<16x128xf32>
    %237 = vector.extract_strided_slice %223 {offsets = [2, 0, 0], sizes = [1, 16, 128], strides = [1, 1, 1]} : vector<3x16x128xf32> to vector<1x16x128xf32>
    %238 = vector.shape_cast %237 : vector<1x16x128xf32> to vector<16x128xf32>
    %239 = arith.mulf %236, %238 : vector<16x128xf32>
    %240 = arith.addf %234, %239 : vector<16x128xf32>
    %241 = math.sqrt %240 : vector<16x128xf32>
    %c0_21 = arith.constant 0 : index
    %c0_22 = arith.constant 0 : index
    %242 = vector.load %arg6[%c0_21, %c0_22] : memref<16x128xf32, #tpu.memory_space<vmem>>, vector<16x128xf32>
    tpu.vector_store %arg6[%c0_21, %c0_22], %241 {strides = array<i32>} : memref<16x128xf32, #tpu.memory_space<vmem>>, vector<16x128xf32>,
    %243 = tpu.concatenate %132, %133, %134, %154, %155, %156, %159, %162, %165 in 1 : vector<16x1xf32>, vector<16x1xf32>, vector<16x1xf32>, vector<16x1xf32>, vector<16x1xf32>, vector<16x1xf32>, vector<16x1xf32>, vector<16x1xf32>, vector<16x1xf32> -> vector<16x9xf32>
    %c0_23 = arith.constant 0 : index
    %c0_24 = arith.constant 0 : index
    %244 = vector.load %arg7[%c0_23, %c0_24] : memref<16x9xf32, #tpu.memory_space<vmem>>, vector<16x9xf32>
    tpu.vector_store %arg7[%c0_23, %c0_24], %243 {strides = array<i32>} : memref<16x9xf32, #tpu.memory_space<vmem>>, vector<16x9xf32>,
    return
  }
  func.func @transform_0(%arg0: i32) -> (i32, i32, i32) {
    %c0_i32 = arith.constant 0 : i32
    %c0_i32_0 = arith.constant 0 : i32
    %c0_i32_1 = arith.constant 0 : i32
    return %c0_i32, %arg0, %c0_i32_0 : i32, i32, i32
  }
  func.func @transform_1(%arg0: i32) -> (i32, i32) {
    %c0_i32 = arith.constant 0 : i32
    %c0_i32_0 = arith.constant 0 : i32
    %c0_i32_1 = arith.constant 0 : i32
    return %c0_i32, %c0_i32_0 : i32, i32
  }
  func.func @transform_2(%arg0: i32) -> (i32, i32) {
    %c0_i32 = arith.constant 0 : i32
    %c0_i32_0 = arith.constant 0 : i32
    %c0_i32_1 = arith.constant 0 : i32
    return %c0_i32, %c0_i32_0 : i32, i32
  }
  func.func @transform_3(%arg0: i32) -> (i32, i32) {
    %c0_i32 = arith.constant 0 : i32
    %c0_i32_0 = arith.constant 0 : i32
    %c0_i32_1 = arith.constant 0 : i32
    return %c0_i32, %c0_i32_0 : i32, i32
  }
  func.func @transform_4(%arg0: i32) -> (i32, i32) {
    %c0_i32 = arith.constant 0 : i32
    %c0_i32_0 = arith.constant 0 : i32
    %c0_i32_1 = arith.constant 0 : i32
    return %c0_i32, %c0_i32_0 : i32, i32
  }
  func.func @transform_5(%arg0: i32) -> (i32, i32) {
    %c0_i32 = arith.constant 0 : i32
    %c0_i32_0 = arith.constant 0 : i32
    return %arg0, %c0_i32 : i32, i32
  }
  func.func @transform_6(%arg0: i32) -> (i32, i32) {
    %c0_i32 = arith.constant 0 : i32
    %c0_i32_0 = arith.constant 0 : i32
    return %arg0, %c0_i32 : i32, i32
  }
}

</mosaic_0001>

<llo_original>
// kernel: equiv_transformer_forward.1
$region0: #{equiv_transformer_forward.1}
  #allocation0 [shape = 'u32[]', space=smem, size = 0x4, offset = 0x4, fixed_abs, tag = 'smem constant byte address 0x4 - core index']
  #allocation1 [shape = 'u32[72,128]{1,0:T(1,128)}', space=vmem, size = 0x9000, scoped, tag = 'internal scratch']
  %s0 = inlined_call_operand.vmem [shape: bf16[3,16,256], index: 0, kind: input, shape index: {}]
  %s1 = inlined_call_operand.vmem [shape: bf16[256,256], index: 1, kind: input, shape index: {}]
  %s2 = inlined_call_operand.vmem [shape: bf16[128,256], index: 2, kind: input, shape index: {}]
  %s3 = inlined_call_operand.vmem [shape: f32[128,3], index: 3, kind: input, shape index: {}]
  %s4 = inlined_call_operand.vmem [shape: bf16[256,128], index: 4, kind: input, shape index: {}]
  %s5 = inlined_call_operand.vmem [shape: f32[16,128], index: 5, kind: output, shape index: {0}]
  %s6 = inlined_call_operand.vmem [shape: f32[16,9], index: 6, kind: output, shape index: {1}]
  %7 = xla_tuple %s5, %s6
  %s8 = sld [smem:[#allocation0]]
  $region38: #{equiv_transformer_forward.1} parent=0
    _
  %s10 = ssub.s32 1, %s8
  %s11 = scalar_select 0, %s10, %s8
  // Predicated region
  $region2: #{equiv_transformer_forward.1} parent=0 // pred_check
    _
  $region3: #{equiv_transformer_forward.1} parent=0 // pred_check_branch
    %13 = sbr.rel (0) target = $region5
  $region4: #{equiv_transformer_forward.1} parent=0 // pred_region
    _
  $region5: #{equiv_transformer_forward.1} parent=0 // pred_fallthru
    _
  // Predicated region
  $region6: #{equiv_transformer_forward.1} parent=0 // pred_check
    _
  $region7: #{equiv_transformer_forward.1} parent=0 // pred_check_branch
    %15 = sbr.rel (0) target = $region9
  $region8: #{equiv_transformer_forward.1} parent=0 // pred_region
    _
  $region9: #{equiv_transformer_forward.1} parent=0 // pred_fallthru
    _
  // Predicated region
  $region10: #{equiv_transformer_forward.1} parent=0 // pred_check
    _
  $region11: #{equiv_transformer_forward.1} parent=0 // pred_check_branch
    %17 = sbr.rel (0) target = $region13
  $region12: #{equiv_transformer_forward.1} parent=0 // pred_region
    _
  $region13: #{equiv_transformer_forward.1} parent=0 // pred_fallthru
    _
  // Predicated region
  $region14: #{equiv_transformer_forward.1} parent=0 // pred_check
    _
  $region15: #{equiv_transformer_forward.1} parent=0 // pred_check_branch
    %19 = sbr.rel (0) target = $region17
  $region16: #{equiv_transformer_forward.1} parent=0 // pred_region
    _
  $region17: #{equiv_transformer_forward.1} parent=0 // pred_fallthru
    _
  // Predicated region
  $region18: #{equiv_transformer_forward.1} parent=0 // pred_check
    _
  $region19: #{equiv_transformer_forward.1} parent=0 // pred_check_branch
    %21 = sbr.rel (0) target = $region21
  $region20: #{equiv_transformer_forward.1} parent=0 // pred_region
    _
  $region21: #{equiv_transformer_forward.1} parent=0 // pred_fallthru
    _
  %v22 = vld [vmem:[%s0] sm:$0xff]
  %v23 = vld [vmem:[%s0 + $0x8] sm:$0xff]
  %v24 = vld [vmem:[%s0 + $0x10] sm:$0xff]
  %v25 = vld [vmem:[%s0 + $0x18] sm:$0xff]
  %v26 = vld [vmem:[%s0 + $0x20] sm:$0xff]
  %v27 = vld [vmem:[%s0 + $0x28] sm:$0xff]
  %v28 = vld [vmem:[%s1] sm:$0xff]
  %v29 = vld [vmem:[%s1 + $0x8] sm:$0xff]
  %v30 = vld [vmem:[%s1 + $0x10] sm:$0xff]
  %v31 = vld [vmem:[%s1 + $0x18] sm:$0xff]
  %v32 = vld [vmem:[%s1 + $0x20] sm:$0xff]
  %v33 = vld [vmem:[%s1 + $0x28] sm:$0xff]
  %v34 = vld [vmem:[%s1 + $0x30] sm:$0xff]
  %v35 = vld [vmem:[%s1 + $0x38] sm:$0xff]
  %v36 = vld [vmem:[%s1 + $0x40] sm:$0xff]
  %v37 = vld [vmem:[%s1 + $0x48] sm:$0xff]
  %v38 = vld [vmem:[%s1 + $0x50] sm:$0xff]
  %v39 = vld [vmem:[%s1 + $0x58] sm:$0xff]
  %v40 = vld [vmem:[%s1 + $0x60] sm:$0xff]
  %v41 = vld [vmem:[%s1 + $0x68] sm:$0xff]
  %v42 = vld [vmem:[%s1 + $0x70] sm:$0xff]
  %v43 = vld [vmem:[%s1 + $0x78] sm:$0xff]
  %v44 = vld [vmem:[%s1 + $0x80] sm:$0xff]
  %v45 = vld [vmem:[%s1 + $0x88] sm:$0xff]
  %v46 = vld [vmem:[%s1 + $0x90] sm:$0xff]
  %v47 = vld [vmem:[%s1 + $0x98] sm:$0xff]
  %v48 = vld [vmem:[%s1 + $0xa0] sm:$0xff]
  %v49 = vld [vmem:[%s1 + $0xa8] sm:$0xff]
  %v50 = vld [vmem:[%s1 + $0xb0] sm:$0xff]
  %v51 = vld [vmem:[%s1 + $0xb8] sm:$0xff]
  %v52 = vld [vmem:[%s1 + $0xc0] sm:$0xff]
  %v53 = vld [vmem:[%s1 + $0xc8] sm:$0xff]
  %v54 = vld [vmem:[%s1 + $0xd0] sm:$0xff]
  %v55 = vld [vmem:[%s1 + $0xd8] sm:$0xff]
  %v56 = vld [vmem:[%s1 + $0xe0] sm:$0xff]
  %v57 = vld [vmem:[%s1 + $0xe8] sm:$0xff]
  %v58 = vld [vmem:[%s1 + $0xf0] sm:$0xff]
  %v59 = vld [vmem:[%s1 + $0xf8] sm:$0xff]
  %v66 = vunpack.c.l.b16 %v22
  %v67 = vunpack.c.h.b16 %v22
  %v68 = vunpack.c.l.b16 %v23
  %v69 = vunpack.c.h.b16 %v23
  %v70 = vunpack.c.l.b16 %v24
  %v71 = vunpack.c.h.b16 %v24
  %v72 = vunpack.c.l.b16 %v25
  %v73 = vunpack.c.h.b16 %v25
  %v74 = vunpack.c.l.b16 %v26
  %v75 = vunpack.c.h.b16 %v26
  %v76 = vunpack.c.l.b16 %v27
  %v77 = vunpack.c.h.b16 %v27
  %v78 = vpack.c.b16 %v68, %v66
  %v79 = vpack.c.b16 %v69, %v67
  %v80 = vpack.c.b16 %v72, %v70
  %v81 = vpack.c.b16 %v73, %v71
  %v82 = vpack.c.b16 %v76, %v74
  %v83 = vpack.c.b16 %v77, %v75
  %v122 = vunpack.c.l.b16 %v28
  %v123 = vunpack.c.h.b16 %v28
  %v124 = vunpack.c.l.b16 %v29
  %v125 = vunpack.c.h.b16 %v29
  %v126 = vunpack.c.l.b16 %v30
  %v127 = vunpack.c.h.b16 %v30
  %v128 = vunpack.c.l.b16 %v31
  %v129 = vunpack.c.h.b16 %v31
  %v130 = vunpack.c.l.b16 %v32
  %v131 = vunpack.c.h.b16 %v32
  %v132 = vunpack.c.l.b16 %v33
  %v133 = vunpack.c.h.b16 %v33
  %v134 = vunpack.c.l.b16 %v34
  %v135 = vunpack.c.h.b16 %v34
  %v136 = vunpack.c.l.b16 %v35
  %v137 = vunpack.c.h.b16 %v35
  %v138 = vunpack.c.l.b16 %v36
  %v139 = vunpack.c.h.b16 %v36
  %v140 = vunpack.c.l.b16 %v37
  %v141 = vunpack.c.h.b16 %v37
  %v142 = vunpack.c.l.b16 %v38
  %v143 = vunpack.c.h.b16 %v38
  %v144 = vunpack.c.l.b16 %v39
  %v145 = vunpack.c.h.b16 %v39
  %v146 = vunpack.c.l.b16 %v40
  %v147 = vunpack.c.h.b16 %v40
  %v148 = vunpack.c.l.b16 %v41
  %v149 = vunpack.c.h.b16 %v41
  %v150 = vunpack.c.l.b16 %v42
  %v151 = vunpack.c.h.b16 %v42
  %v152 = vunpack.c.l.b16 %v43
  %v153 = vunpack.c.h.b16 %v43
  %v154 = vunpack.c.l.b16 %v44
  %v155 = vunpack.c.h.b16 %v44
  %v156 = vunpack.c.l.b16 %v45
  %v157 = vunpack.c.h.b16 %v45
  %v158 = vunpack.c.l.b16 %v46
  %v159 = vunpack.c.h.b16 %v46
  %v160 = vunpack.c.l.b16 %v47
  %v161 = vunpack.c.h.b16 %v47
  %v162 = vunpack.c.l.b16 %v48
  %v163 = vunpack.c.h.b16 %v48
  %v164 = vunpack.c.l.b16 %v49
  %v165 = vunpack.c.h.b16 %v49
  %v166 = vunpack.c.l.b16 %v50
  %v167 = vunpack.c.h.b16 %v50
  %v168 = vunpack.c.l.b16 %v51
  %v169 = vunpack.c.h.b16 %v51
  %v170 = vunpack.c.l.b16 %v52
  %v171 = vunpack.c.h.b16 %v52
  %v172 = vunpack.c.l.b16 %v53
  %v173 = vunpack.c.h.b16 %v53
  %v174 = vunpack.c.l.b16 %v54
  %v175 = vunpack.c.h.b16 %v54
  %v176 = vunpack.c.l.b16 %v55
  %v177 = vunpack.c.h.b16 %v55
  %v178 = vunpack.c.l.b16 %v56
  %v179 = vunpack.c.h.b16 %v56
  %v180 = vunpack.c.l.b16 %v57
  %v181 = vunpack.c.h.b16 %v57
  %v182 = vunpack.c.l.b16 %v58
  %v183 = vunpack.c.h.b16 %v58
  %v184 = vunpack.c.l.b16 %v59
  %v185 = vunpack.c.h.b16 %v59
  %v186 = vpack.c.b16 %v124, %v122
  %v187 = vpack.c.b16 %v125, %v123
  %v188 = vpack.c.b16 %v128, %v126
  %v189 = vpack.c.b16 %v129, %v127
  %v190 = vpack.c.b16 %v132, %v130
  %v191 = vpack.c.b16 %v133, %v131
  %v192 = vpack.c.b16 %v136, %v134
  %v193 = vpack.c.b16 %v137, %v135
  %v194 = vpack.c.b16 %v140, %v138
  %v195 = vpack.c.b16 %v141, %v139
  %v196 = vpack.c.b16 %v144, %v142
  %v197 = vpack.c.b16 %v145, %v143
  %v198 = vpack.c.b16 %v148, %v146
  %v199 = vpack.c.b16 %v149, %v147
  %v200 = vpack.c.b16 %v152, %v150
  %v201 = vpack.c.b16 %v153, %v151
  %v202 = vpack.c.b16 %v156, %v154
  %v203 = vpack.c.b16 %v157, %v155
  %v204 = vpack.c.b16 %v160, %v158
  %v205 = vpack.c.b16 %v161, %v159
  %v206 = vpack.c.b16 %v164, %v162
  %v207 = vpack.c.b16 %v165, %v163
  %v208 = vpack.c.b16 %v168, %v166
  %v209 = vpack.c.b16 %v169, %v167
  %v210 = vpack.c.b16 %v172, %v170
  %v211 = vpack.c.b16 %v173, %v171
  %v212 = vpack.c.b16 %v176, %v174
  %v213 = vpack.c.b16 %v177, %v175
  %v214 = vpack.c.b16 %v180, %v178
  %v215 = vpack.c.b16 %v181, %v179
  %v216 = vpack.c.b16 %v184, %v182
  %v217 = vpack.c.b16 %v185, %v183
  %250 = vmatpush.bf16.msra.mxu0 %v200
  %251 = vmatpush.bf16.msra.mxu0 %v198
  %252 = vmatpush.bf16.msra.mxu0 %v196
  %253 = vmatpush.bf16.msra.mxu0 %v194
  %254 = vmatpush.bf16.msra.mxu0 %v192
  %255 = vmatpush.bf16.msra.mxu0 %v190
  %256 = vmatpush.bf16.msra.mxu0 %v188
  %257 = vmatpush.bf16.msra.mxu0 %v186
  %258 = vmatmul.bf16.gmra.mxu0 %v78
  %v259 = vpop.f32.mrf.mxu0
  %v260 = vadd.f32 0.0, %v259
  %v261 = vpop.f32.mrf.mxu0
  %v262 = vadd.f32 0.0, %v261
  %263 = vmatmul.bf16.gmra.mxu0 %v80
  %v264 = vpop.f32.mrf.mxu0
  %v265 = vadd.f32 0.0, %v264
  %v266 = vpop.f32.mrf.mxu0
  %v267 = vadd.f32 0.0, %v266
  %268 = vmatmul.bf16.gmra.mxu0 %v82
  %v269 = vpop.f32.mrf.mxu0
  %v270 = vadd.f32 0.0, %v269
  %v271 = vpop.f32.mrf.mxu0
  %v272 = vadd.f32 0.0, %v271
  %273 = vdwg.mxu0
  %274 = vmatpush.bf16.msra.mxu0 %v216
  %275 = vmatpush.bf16.msra.mxu0 %v214
  %276 = vmatpush.bf16.msra.mxu0 %v212
  %277 = vmatpush.bf16.msra.mxu0 %v210
  %278 = vmatpush.bf16.msra.mxu0 %v208
  %279 = vmatpush.bf16.msra.mxu0 %v206
  %280 = vmatpush.bf16.msra.mxu0 %v204
  %281 = vmatpush.bf16.msra.mxu0 %v202
  %282 = vmatmul.bf16.gmra.mxu0 %v79
  %v283 = vpop.f32.mrf.mxu0
  %v284 = vadd.f32 %v260, %v283
  %v285 = vpop.f32.mrf.mxu0
  %v286 = vadd.f32 %v262, %v285
  %287 = vmatmul.bf16.gmra.mxu0 %v81
  %v288 = vpop.f32.mrf.mxu0
  %v289 = vadd.f32 %v265, %v288
  %v290 = vpop.f32.mrf.mxu0
  %v291 = vadd.f32 %v267, %v290
  %292 = vmatmul.bf16.gmra.mxu0 %v83
  %v293 = vpop.f32.mrf.mxu0
  %v294 = vadd.f32 %v270, %v293
  %v295 = vpop.f32.mrf.mxu0
  %v296 = vadd.f32 %v272, %v295
  %297 = vdwg.mxu0
  %298 = vmatpush.bf16.msra.mxu0 %v201
  %299 = vmatpush.bf16.msra.mxu0 %v199
  %300 = vmatpush.bf16.msra.mxu0 %v197
  %301 = vmatpush.bf16.msra.mxu0 %v195
  %302 = vmatpush.bf16.msra.mxu0 %v193
  %303 = vmatpush.bf16.msra.mxu0 %v191
  %304 = vmatpush.bf16.msra.mxu0 %v189
  %305 = vmatpush.bf16.msra.mxu0 %v187
  %306 = vmatmul.bf16.gmra.mxu0 %v78
  %v307 = vpop.f32.mrf.mxu0
  %v308 = vadd.f32 0.0, %v307
  %v309 = vpop.f32.mrf.mxu0
  %v310 = vadd.f32 0.0, %v309
  %311 = vmatmul.bf16.gmra.mxu0 %v80
  %v312 = vpop.f32.mrf.mxu0
  %v313 = vadd.f32 0.0, %v312
  %v314 = vpop.f32.mrf.mxu0
  %v315 = vadd.f32 0.0, %v314
  %316 = vmatmul.bf16.gmra.mxu0 %v82
  %v317 = vpop.f32.mrf.mxu0
  %v318 = vadd.f32 0.0, %v317
  %v319 = vpop.f32.mrf.mxu0
  %v320 = vadd.f32 0.0, %v319
  %321 = vdwg.mxu0
  %322 = vmatpush.bf16.msra.mxu0 %v217
  %323 = vmatpush.bf16.msra.mxu0 %v215
  %324 = vmatpush.bf16.msra.mxu0 %v213
  %325 = vmatpush.bf16.msra.mxu0 %v211
  %326 = vmatpush.bf16.msra.mxu0 %v209
  %327 = vmatpush.bf16.msra.mxu0 %v207
  %328 = vmatpush.bf16.msra.mxu0 %v205
  %329 = vmatpush.bf16.msra.mxu0 %v203
  %330 = vmatmul.bf16.gmra.mxu0 %v79
  %v331 = vpop.f32.mrf.mxu0
  %v332 = vadd.f32 %v308, %v331
  %v333 = vpop.f32.mrf.mxu0
  %v334 = vadd.f32 %v310, %v333
  %335 = vmatmul.bf16.gmra.mxu0 %v81
  %v336 = vpop.f32.mrf.mxu0
  %v337 = vadd.f32 %v313, %v336
  %v338 = vpop.f32.mrf.mxu0
  %v339 = vadd.f32 %v315, %v338
  %340 = vmatmul.bf16.gmra.mxu0 %v83
  %v341 = vpop.f32.mrf.mxu0
  %v342 = vadd.f32 %v318, %v341
  %v343 = vpop.f32.mrf.mxu0
  %v344 = vadd.f32 %v320, %v343
  %345 = vdwg.mxu0
  %v346 = vmul.f32 %v284, %v332
  %v347 = vmul.f32 %v286, %v334
  %v348 = vmul.f32 %v289, %v337
  %v349 = vmul.f32 %v291, %v339
  %v350 = vadd.f32 %v346, %v348
  %v351 = vadd.f32 %v347, %v349
  %v352 = vmul.f32 %v294, %v342
  %v353 = vmul.f32 %v296, %v344
  %v354 = vadd.f32 %v350, %v352
  %v355 = vadd.f32 %v351, %v353
  %v356 = vmul.f32 %v332, %v332
  %v357 = vmul.f32 %v334, %v334
  %v358 = vmul.f32 %v337, %v337
  %v359 = vmul.f32 %v339, %v339
  %v360 = vadd.f32 %v356, %v358
  %v361 = vadd.f32 %v357, %v359
  %v362 = vmul.f32 %v342, %v342
  %v363 = vmul.f32 %v344, %v344
  %v364 = vadd.f32 %v360, %v362
  %v365 = vadd.f32 %v361, %v363
  %v366 = vmin.f32 %v354, 0.0
  %v367 = vmin.f32 %v355, 0.0
  %v368 = vmul.f32 %v366, 0.8
  %v369 = vmul.f32 %v367, 0.8
  %v370 = vadd.f32 %v364, 1e-06
  %v371 = vadd.f32 %v365, 1e-06
  %v372 = vrcp.pop %v370
  %v373 = vrcp.pop %v371
  %v374 = vmul.f32 %v368, %v372
  %v375 = vmul.f32 %v369, %v373
  %v376 = vmul.f32 %v374, %v332
  %v377 = vmul.f32 %v375, %v334
  %v378 = vmul.f32 %v374, %v337
  %v379 = vmul.f32 %v375, %v339
  %v380 = vmul.f32 %v374, %v342
  %v381 = vmul.f32 %v375, %v344
  %v382 = vsub.f32 %v284, %v376
  %v383 = vsub.f32 %v286, %v377
  %v384 = vsub.f32 %v289, %v378
  %v385 = vsub.f32 %v291, %v379
  %v386 = vsub.f32 %v294, %v380
  %v387 = vsub.f32 %v296, %v381
  %v388 = vpack.c.bf16 %v383, %v382
  %v389 = vpack.c.bf16 %v385, %v384
  %v390 = vpack.c.bf16 %v387, %v386
  %v391 = vld [vmem:[%s2] sm:$0xff]
  %v392 = vld [vmem:[%s2 + $0x8] sm:$0xff]
  %v393 = vld [vmem:[%s2 + $0x10] sm:$0xff]
  %v394 = vld [vmem:[%s2 + $0x18] sm:$0xff]
  %v395 = vld [vmem:[%s2 + $0x20] sm:$0xff]
  %v396 = vld [vmem:[%s2 + $0x28] sm:$0xff]
  %v397 = vld [vmem:[%s2 + $0x30] sm:$0xff]
  %v398 = vld [vmem:[%s2 + $0x38] sm:$0xff]
  %v399 = vld [vmem:[%s2 + $0x40] sm:$0xff]
  %v400 = vld [vmem:[%s2 + $0x48] sm:$0xff]
  %v401 = vld [vmem:[%s2 + $0x50] sm:$0xff]
  %v402 = vld [vmem:[%s2 + $0x58] sm:$0xff]
  %v403 = vld [vmem:[%s2 + $0x60] sm:$0xff]
  %v404 = vld [vmem:[%s2 + $0x68] sm:$0xff]
  %v405 = vld [vmem:[%s2 + $0x70] sm:$0xff]
  %v406 = vld [vmem:[%s2 + $0x78] sm:$0xff]
  %v423 = vunpack.c.l.b16 %v391
  %v424 = vunpack.c.h.b16 %v391
  %v425 = vunpack.c.l.b16 %v392
  %v426 = vunpack.c.h.b16 %v392
  %v427 = vunpack.c.l.b16 %v393
  %v428 = vunpack.c.h.b16 %v393
  %v429 = vunpack.c.l.b16 %v394
  %v430 = vunpack.c.h.b16 %v394
  %v431 = vunpack.c.l.b16 %v395
  %v432 = vunpack.c.h.b16 %v395
  %v433 = vunpack.c.l.b16 %v396
  %v434 = vunpack.c.h.b16 %v396
  %v435 = vunpack.c.l.b16 %v397
  %v436 = vunpack.c.h.b16 %v397
  %v437 = vunpack.c.l.b16 %v398
  %v438 = vunpack.c.h.b16 %v398
  %v439 = vunpack.c.l.b16 %v399
  %v440 = vunpack.c.h.b16 %v399
  %v441 = vunpack.c.l.b16 %v400
  %v442 = vunpack.c.h.b16 %v400
  %v443 = vunpack.c.l.b16 %v401
  %v444 = vunpack.c.h.b16 %v401
  %v445 = vunpack.c.l.b16 %v402
  %v446 = vunpack.c.h.b16 %v402
  %v447 = vunpack.c.l.b16 %v403
  %v448 = vunpack.c.h.b16 %v403
  %v449 = vunpack.c.l.b16 %v404
  %v450 = vunpack.c.h.b16 %v404
  %v451 = vunpack.c.l.b16 %v405
  %v452 = vunpack.c.h.b16 %v405
  %v453 = vunpack.c.l.b16 %v406
  %v454 = vunpack.c.h.b16 %v406
  %v455 = vpack.c.b16 %v425, %v423
  %v456 = vpack.c.b16 %v426, %v424
  %v457 = vpack.c.b16 %v429, %v427
  %v458 = vpack.c.b16 %v430, %v428
  %v459 = vpack.c.b16 %v433, %v431
  %v460 = vpack.c.b16 %v434, %v432
  %v461 = vpack.c.b16 %v437, %v435
  %v462 = vpack.c.b16 %v438, %v436
  %v463 = vpack.c.b16 %v441, %v439
  %v464 = vpack.c.b16 %v442, %v440
  %v465 = vpack.c.b16 %v445, %v443
  %v466 = vpack.c.b16 %v446, %v444
  %v467 = vpack.c.b16 %v449, %v447
  %v468 = vpack.c.b16 %v450, %v448
  %v469 = vpack.c.b16 %v453, %v451
  %v470 = vpack.c.b16 %v454, %v452
  %487 = vmatpush.bf16.msra.mxu0 %v469
  %488 = vmatpush.bf16.msra.mxu0 %v467
  %489 = vmatpush.bf16.msra.mxu0 %v465
  %490 = vmatpush.bf16.msra.mxu0 %v463
  %491 = vmatpush.bf16.msra.mxu0 %v461
  %492 = vmatpush.bf16.msra.mxu0 %v459
  %493 = vmatpush.bf16.msra.mxu0 %v457
  %494 = vmatpush.bf16.msra.mxu0 %v455
  %495 = vmatmul.bf16.gmra.mxu0 %v388
  %v496 = vpop.f32.mrf.mxu0
  %v497 = vadd.f32 0.0, %v496
  %v498 = vpop.f32.mrf.mxu0
  %v499 = vadd.f32 0.0, %v498
  %500 = vmatmul.bf16.gmra.mxu0 %v389
  %v501 = vpop.f32.mrf.mxu0
  %v502 = vadd.f32 0.0, %v501
  %v503 = vpop.f32.mrf.mxu0
  %v504 = vadd.f32 0.0, %v503
  %505 = vmatmul.bf16.gmra.mxu0 %v390
  %v506 = vpop.f32.mrf.mxu0
  %v507 = vadd.f32 0.0, %v506
  %v508 = vpop.f32.mrf.mxu0
  %v509 = vadd.f32 0.0, %v508
  %510 = vdwg.mxu0
  %511 = vmatpush.bf16.msra.mxu0 %v470
  %512 = vmatpush.bf16.msra.mxu0 %v468
  %513 = vmatpush.bf16.msra.mxu0 %v466
  %514 = vmatpush.bf16.msra.mxu0 %v464
  %515 = vmatpush.bf16.msra.mxu0 %v462
  %516 = vmatpush.bf16.msra.mxu0 %v460
  %517 = vmatpush.bf16.msra.mxu0 %v458
  %518 = vmatpush.bf16.msra.mxu0 %v456
  %519 = vmatmul.bf16.gmra.mxu0 %v388
  %v520 = vpop.f32.mrf.mxu0
  %v521 = vadd.f32 0.0, %v520
  %v522 = vpop.f32.mrf.mxu0
  %v523 = vadd.f32 0.0, %v522
  %524 = vmatmul.bf16.gmra.mxu0 %v389
  %v525 = vpop.f32.mrf.mxu0
  %v526 = vadd.f32 0.0, %v525
  %v527 = vpop.f32.mrf.mxu0
  %v528 = vadd.f32 0.0, %v527
  %529 = vmatmul.bf16.gmra.mxu0 %v390
  %v530 = vpop.f32.mrf.mxu0
  %v531 = vadd.f32 0.0, %v530
  %v532 = vpop.f32.mrf.mxu0
  %v533 = vadd.f32 0.0, %v532
  %534 = vdwg.mxu0
  %v535 = vmul.f32 %v497, %v521
  %v536 = vmul.f32 %v499, %v523
  %v537 = vmul.f32 %v502, %v526
  %v538 = vmul.f32 %v504, %v528
  %v539 = vadd.f32 %v535, %v537
  %v540 = vadd.f32 %v536, %v538
  %v541 = vmul.f32 %v507, %v531
  %v542 = vmul.f32 %v509, %v533
  %v543 = vadd.f32 %v539, %v541
  %v544 = vadd.f32 %v540, %v542
  %v545 = vmul.f32 %v521, %v521
  %v546 = vmul.f32 %v523, %v523
  %v547 = vmul.f32 %v526, %v526
  %v548 = vmul.f32 %v528, %v528
  %v549 = vadd.f32 %v545, %v547
  %v550 = vadd.f32 %v546, %v548
  %v551 = vmul.f32 %v531, %v531
  %v552 = vmul.f32 %v533, %v533
  %v553 = vadd.f32 %v549, %v551
  %v554 = vadd.f32 %v550, %v552
  %v555 = vmin.f32 %v543, 0.0
  %v556 = vmin.f32 %v544, 0.0
  %v557 = vmul.f32 %v555, 0.8
  %v558 = vmul.f32 %v556, 0.8
  %v559 = vadd.f32 %v553, 1e-06
  %v560 = vadd.f32 %v554, 1e-06
  %v561 = vrcp.pop %v559
  %v562 = vrcp.pop %v560
  %v563 = vmul.f32 %v557, %v561
  %v564 = vmul.f32 %v558, %v562
  %v565 = vmul.f32 %v563, %v521
  %v566 = vmul.f32 %v564, %v523
  %v567 = vmul.f32 %v563, %v526
  %v568 = vmul.f32 %v564, %v528
  %v569 = vmul.f32 %v563, %v531
  %v570 = vmul.f32 %v564, %v533
  %v571 = vsub.f32 %v497, %v565
  %v572 = vsub.f32 %v499, %v566
  %v573 = vsub.f32 %v502, %v567
  %v574 = vsub.f32 %v504, %v568
  %v575 = vsub.f32 %v507, %v569
  %v576 = vsub.f32 %v509, %v570
  %v577 = vld [vmem:[%s3] sm:$0xff]
  %v578 = vld [vmem:[%s3 + $0x8] sm:$0xff]
  %v579 = vld [vmem:[%s3 + $0x10] sm:$0xff]
  %v580 = vld [vmem:[%s3 + $0x18] sm:$0xff]
  %v581 = vld [vmem:[%s3 + $0x20] sm:$0xff]
  %v582 = vld [vmem:[%s3 + $0x28] sm:$0xff]
  %v583 = vld [vmem:[%s3 + $0x30] sm:$0xff]
  %v584 = vld [vmem:[%s3 + $0x38] sm:$0xff]
  %v585 = vld [vmem:[%s3 + $0x40] sm:$0xff]
  %v586 = vld [vmem:[%s3 + $0x48] sm:$0xff]
  %v587 = vld [vmem:[%s3 + $0x50] sm:$0xff]
  %v588 = vld [vmem:[%s3 + $0x58] sm:$0xff]
  %v589 = vld [vmem:[%s3 + $0x60] sm:$0xff]
  %v590 = vld [vmem:[%s3 + $0x68] sm:$0xff]
  %v591 = vld [vmem:[%s3 + $0x70] sm:$0xff]
  %v592 = vld [vmem:[%s3 + $0x78] sm:$0xff]
  %593 = vmatpush.msra.mxu0 %v592
  %594 = vmatpush.msra.mxu0 %v591
  %595 = vmatpush.msra.mxu0 %v590
  %596 = vmatpush.msra.mxu0 %v589
  %597 = vmatpush.msra.mxu0 %v588
  %598 = vmatpush.msra.mxu0 %v587
  %599 = vmatpush.msra.mxu0 %v586
  %600 = vmatpush.msra.mxu0 %v585
  %601 = vmatpush.msra.mxu0 %v584
  %602 = vmatpush.msra.mxu0 %v583
  %603 = vmatpush.msra.mxu0 %v582
  %604 = vmatpush.msra.mxu0 %v581
  %605 = vmatpush.msra.mxu0 %v580
  %606 = vmatpush.msra.mxu0 %v579
  %607 = vmatpush.msra.mxu0 %v578
  %608 = vmatpush.msra.mxu0 %v577
  %609 = vmatmul.f32.gmra.mxu0 %v571
  %v610 = vpop.f32.mrf.mxu0
  %v611 = vadd.f32 0.0, %v610
  %612 = vmatmul.f32.gmra.mxu0 %v572
  %v613 = vpop.f32.mrf.mxu0
  %v614 = vadd.f32 0.0, %v613
  %615 = vmatmul.f32.gmra.mxu0 %v573
  %v616 = vpop.f32.mrf.mxu0
  %v617 = vadd.f32 0.0, %v616
  %618 = vmatmul.f32.gmra.mxu0 %v574
  %v619 = vpop.f32.mrf.mxu0
  %v620 = vadd.f32 0.0, %v619
  %621 = vmatmul.f32.gmra.mxu0 %v575
  %v622 = vpop.f32.mrf.mxu0
  %v623 = vadd.f32 0.0, %v622
  %624 = vmatmul.f32.gmra.mxu0 %v576
  %v625 = vpop.f32.mrf.mxu0
  %v626 = vadd.f32 0.0, %v625
  %627 = vdwg.mxu0
  %v628 = vmul.f32 %v611, %v611
  %v629 = vmul.f32 %v614, %v614
  %v630 = vmul.f32 %v617, %v617
  %v631 = vmul.f32 %v620, %v620
  %v632 = vadd.f32 %v628, %v630
  %v633 = vadd.f32 %v629, %v631
  %v634 = vmul.f32 %v623, %v623
  %v635 = vmul.f32 %v626, %v626
  %v636 = vadd.f32 %v632, %v634
  %v637 = vadd.f32 %v633, %v635
  %v638 = vadd.f32 %v636, 1e-06
  %v639 = vadd.f32 %v637, 1e-06
  %v640 = vrsqrt.pop %v638
  %v641 = vmul.f32 %v640, %v638
  %v642 = vmul.f32 %v641, %v640
  %v643 = vmul.f32 0.5, %v642
  %v644 = vsub.f32 1.5, %v643
  %v645 = vmul.f32 %v640, %v644
  %vm646 = vweird.f32 %v638
  %vm647 = vweird.f32 %v640
  %vm648 = vmor %vm646, %vm647
  %v649 = vsel %vm648, %v640, %v645
  %v650 = vrsqrt.pop %v639
  %v651 = vmul.f32 %v650, %v639
  %v652 = vmul.f32 %v651, %v650
  %v653 = vmul.f32 0.5, %v652
  %v654 = vsub.f32 1.5, %v653
  %v655 = vmul.f32 %v650, %v654
  %vm656 = vweird.f32 %v639
  %vm657 = vweird.f32 %v650
  %vm658 = vmor %vm656, %vm657
  %v659 = vsel %vm658, %v650, %v655
  %v660 = vmul.f32 %v611, %v649
  %v661 = vmul.f32 %v614, %v659
  %v662 = vmul.f32 %v617, %v649
  %v663 = vmul.f32 %v620, %v659
  %v664 = vmul.f32 %v623, %v649
  %v665 = vmul.f32 %v626, %v659
  %668 = vrot.lane.b32.xlu0 %v660, 1
  %v669 = vpop.permute.xlu0 %668
  %670 = vrot.lane.b32.xlu0 %v661, 1
  %v671 = vpop.permute.xlu0 %670
  %v674 = vmul.f32 %v611, %v669
  %v675 = vmul.f32 %v614, %v671
  %678 = vrot.lane.b32.xlu0 %v662, 1
  %v679 = vpop.permute.xlu0 %678
  %680 = vrot.lane.b32.xlu0 %v663, 1
  %v681 = vpop.permute.xlu0 %680
  %v684 = vmul.f32 %v617, %v679
  %v685 = vmul.f32 %v620, %v681
  %v686 = vadd.f32 %v674, %v684
  %v687 = vadd.f32 %v675, %v685
  %690 = vrot.lane.b32.xlu0 %v664, 1
  %v691 = vpop.permute.xlu0 %690
  %692 = vrot.lane.b32.xlu0 %v665, 1
  %v693 = vpop.permute.xlu0 %692
  %v696 = vmul.f32 %v623, %v691
  %v697 = vmul.f32 %v626, %v693
  %v698 = vadd.f32 %v686, %v696
  %v699 = vadd.f32 %v687, %v697
  %v700 = vmul.f32 %v698, %v669
  %v701 = vmul.f32 %v699, %v671
  %v702 = vsub.f32 %v611, %v700
  %v703 = vsub.f32 %v614, %v701
  %v704 = vmul.f32 %v698, %v679
  %v705 = vmul.f32 %v699, %v681
  %v706 = vsub.f32 %v617, %v704
  %v707 = vsub.f32 %v620, %v705
  %v708 = vmul.f32 %v698, %v691
  %v709 = vmul.f32 %v699, %v693
  %v710 = vsub.f32 %v623, %v708
  %v711 = vsub.f32 %v626, %v709
  %v712 = vmul.f32 %v702, %v702
  %v713 = vmul.f32 %v703, %v703
  %v714 = vmul.f32 %v706, %v706
  %v715 = vmul.f32 %v707, %v707
  %v716 = vadd.f32 %v712, %v714
  %v717 = vadd.f32 %v713, %v715
  %v718 = vmul.f32 %v710, %v710
  %v719 = vmul.f32 %v711, %v711
  %v720 = vadd.f32 %v716, %v718
  %v721 = vadd.f32 %v717, %v719
  %v722 = vadd.f32 %v720, 1e-06
  %v723 = vadd.f32 %v721, 1e-06
  %v724 = vrsqrt.pop %v722
  %v725 = vmul.f32 %v724, %v722
  %v726 = vmul.f32 %v725, %v724
  %v727 = vmul.f32 0.5, %v726
  %v728 = vsub.f32 1.5, %v727
  %v729 = vmul.f32 %v724, %v728
  %vm730 = vweird.f32 %v722
  %vm731 = vweird.f32 %v724
  %vm732 = vmor %vm730, %vm731
  %v733 = vsel %vm732, %v724, %v729
  %v734 = vrsqrt.pop %v723
  %v735 = vmul.f32 %v734, %v723
  %v736 = vmul.f32 %v735, %v734
  %v737 = vmul.f32 0.5, %v736
  %v738 = vsub.f32 1.5, %v737
  %v739 = vmul.f32 %v734, %v738
  %vm740 = vweird.f32 %v723
  %vm741 = vweird.f32 %v734
  %vm742 = vmor %vm740, %vm741
  %v743 = vsel %vm742, %v734, %v739
  %v744 = vmul.f32 %v702, %v733
  %v745 = vmul.f32 %v703, %v743
  %v746 = vmul.f32 %v706, %v733
  %v747 = vmul.f32 %v707, %v743
  %v748 = vmul.f32 %v710, %v733
  %v749 = vmul.f32 %v711, %v743
  %752 = vrot.lane.b32.xlu0 %v748, 127
  %v753 = vpop.permute.xlu0 %752
  %754 = vrot.lane.b32.xlu0 %v749, 127
  %v755 = vpop.permute.xlu0 %754
  %v758 = vmul.f32 %v662, %v753
  %v759 = vmul.f32 %v663, %v755
  %762 = vrot.lane.b32.xlu0 %v746, 127
  %v763 = vpop.permute.xlu0 %762
  %764 = vrot.lane.b32.xlu0 %v747, 127
  %v765 = vpop.permute.xlu0 %764
  %v768 = vmul.f32 %v664, %v763
  %v769 = vmul.f32 %v665, %v765
  %v770 = vsub.f32 %v758, %v768
  %v771 = vsub.f32 %v759, %v769
  %774 = vrot.lane.b32.xlu0 %v744, 127
  %v775 = vpop.permute.xlu0 %774
  %776 = vrot.lane.b32.xlu0 %v745, 127
  %v777 = vpop.permute.xlu0 %776
  %v780 = vmul.f32 %v664, %v775
  %v781 = vmul.f32 %v665, %v777
  %v782 = vmul.f32 %v660, %v753
  %v783 = vmul.f32 %v661, %v755
  %v784 = vsub.f32 %v780, %v782
  %v785 = vsub.f32 %v781, %v783
  %v786 = vmul.f32 %v660, %v763
  %v787 = vmul.f32 %v661, %v765
  %v788 = vmul.f32 %v662, %v775
  %v789 = vmul.f32 %v663, %v777
  %v790 = vsub.f32 %v786, %v788
  %v791 = vsub.f32 %v787, %v789
  %v792 = vunpack.c.l.bf16 %v22
  %v793 = vunpack.c.h.bf16 %v22
  %v794 = vunpack.c.l.bf16 %v23
  %v795 = vunpack.c.h.bf16 %v23
  %796 = vset.pattern.permute.xlu0 0
  %797 = vperm.xlu0 %796, %v660
  %v798 = vpop.permute.xlu0 %797
  %800 = vset.pattern.permute.xlu0 0
  %801 = vperm.xlu0 %800, %v661
  %v802 = vpop.permute.xlu0 %801
  %v804 = vmul.f32 %v798, %v792
  %v805 = vmul.f32 %v798, %v793
  %v806 = vmul.f32 %v802, %v794
  %v807 = vmul.f32 %v802, %v795
  %v808 = vunpack.c.l.bf16 %v24
  %v809 = vunpack.c.h.bf16 %v24
  %v810 = vunpack.c.l.bf16 %v25
  %v811 = vunpack.c.h.bf16 %v25
  %812 = vset.pattern.permute.xlu0 0
  %813 = vperm.xlu0 %812, %v662
  %v814 = vpop.permute.xlu0 %813
  %816 = vset.pattern.permute.xlu0 0
  %817 = vperm.xlu0 %816, %v663
  %v818 = vpop.permute.xlu0 %817
  %v820 = vmul.f32 %v814, %v808
  %v821 = vmul.f32 %v814, %v809
  %v822 = vmul.f32 %v818, %v810
  %v823 = vmul.f32 %v818, %v811
  %v824 = vadd.f32 %v804, %v820
  %v825 = vadd.f32 %v805, %v821
  %v826 = vadd.f32 %v806, %v822
  %v827 = vadd.f32 %v807, %v823
  %v828 = vunpack.c.l.bf16 %v26
  %v829 = vunpack.c.h.bf16 %v26
  %v830 = vunpack.c.l.bf16 %v27
  %v831 = vunpack.c.h.bf16 %v27
  %832 = vset.pattern.permute.xlu0 0
  %833 = vperm.xlu0 %832, %v664
  %v834 = vpop.permute.xlu0 %833
  %836 = vset.pattern.permute.xlu0 0
  %837 = vperm.xlu0 %836, %v665
  %v838 = vpop.permute.xlu0 %837
  %v840 = vmul.f32 %v834, %v828
  %v841 = vmul.f32 %v834, %v829
  %v842 = vmul.f32 %v838, %v830
  %v843 = vmul.f32 %v838, %v831
  %v844 = vadd.f32 %v824, %v840
  %v845 = vadd.f32 %v825, %v841
  %v846 = vadd.f32 %v826, %v842
  %v847 = vadd.f32 %v827, %v843
  %v848 = vpack.c.bf16 %v845, %v844
  %v849 = vpack.c.bf16 %v847, %v846
  %850 = vset.pattern.permute.xlu0 1
  %851 = vperm.xlu0 %850, %v744
  %v852 = vpop.permute.xlu0 %851
  %854 = vset.pattern.permute.xlu0 1
  %855 = vperm.xlu0 %854, %v745
  %v856 = vpop.permute.xlu0 %855
  %v858 = vmul.f32 %v852, %v792
  %v859 = vmul.f32 %v852, %v793
  %v860 = vmul.f32 %v856, %v794
  %v861 = vmul.f32 %v856, %v795
  %862 = vset.pattern.permute.xlu0 1
  %863 = vperm.xlu0 %862, %v746
  %v864 = vpop.permute.xlu0 %863
  %866 = vset.pattern.permute.xlu0 1
  %867 = vperm.xlu0 %866, %v747
  %v868 = vpop.permute.xlu0 %867
  %v870 = vmul.f32 %v864, %v808
  %v871 = vmul.f32 %v864, %v809
  %v872 = vmul.f32 %v868, %v810
  %v873 = vmul.f32 %v868, %v811
  %v874 = vadd.f32 %v858, %v870
  %v875 = vadd.f32 %v859, %v871
  %v876 = vadd.f32 %v860, %v872
  %v877 = vadd.f32 %v861, %v873
  %878 = vset.pattern.permute.xlu0 1
  %879 = vperm.xlu0 %878, %v748
  %v880 = vpop.permute.xlu0 %879
  %882 = vset.pattern.permute.xlu0 1
  %883 = vperm.xlu0 %882, %v749
  %v884 = vpop.permute.xlu0 %883
  %v886 = vmul.f32 %v880, %v828
  %v887 = vmul.f32 %v880, %v829
  %v888 = vmul.f32 %v884, %v830
  %v889 = vmul.f32 %v884, %v831
  %v890 = vadd.f32 %v874, %v886
  %v891 = vadd.f32 %v875, %v887
  %v892 = vadd.f32 %v876, %v888
  %v893 = vadd.f32 %v877, %v889
  %v894 = vpack.c.bf16 %v891, %v890
  %v895 = vpack.c.bf16 %v893, %v892
  %897 = vset.pattern.permute.xlu0 0
  %898 = vperm.xlu0 %897, %v770
  %v899 = vpop.permute.xlu0 %898
  %902 = vset.pattern.permute.xlu0 0
  %903 = vperm.xlu0 %902, %v771
  %v904 = vpop.permute.xlu0 %903
  %v906 = vmul.f32 %v899, %v792
  %v907 = vmul.f32 %v899, %v793
  %v908 = vmul.f32 %v904, %v794
  %v909 = vmul.f32 %v904, %v795
  %911 = vset.pattern.permute.xlu0 0
  %912 = vperm.xlu0 %911, %v784
  %v913 = vpop.permute.xlu0 %912
  %916 = vset.pattern.permute.xlu0 0
  %917 = vperm.xlu0 %916, %v785
  %v918 = vpop.permute.xlu0 %917
  %v920 = vmul.f32 %v913, %v808
  %v921 = vmul.f32 %v913, %v809
  %v922 = vmul.f32 %v918, %v810
  %v923 = vmul.f32 %v918, %v811
  %v924 = vadd.f32 %v906, %v920
  %v925 = vadd.f32 %v907, %v921
  %v926 = vadd.f32 %v908, %v922
  %v927 = vadd.f32 %v909, %v923
  %929 = vset.pattern.permute.xlu0 0
  %930 = vperm.xlu0 %929, %v790
  %v931 = vpop.permute.xlu0 %930
  %934 = vset.pattern.permute.xlu0 0
  %935 = vperm.xlu0 %934, %v791
  %v936 = vpop.permute.xlu0 %935
  %v938 = vmul.f32 %v931, %v828
  %v939 = vmul.f32 %v931, %v829
  %v940 = vmul.f32 %v936, %v830
  %v941 = vmul.f32 %v936, %v831
  %v942 = vadd.f32 %v924, %v938
  %v943 = vadd.f32 %v925, %v939
  %v944 = vadd.f32 %v926, %v940
  %v945 = vadd.f32 %v927, %v941
  %v946 = vpack.c.bf16 %v943, %v942
  %v947 = vpack.c.bf16 %v945, %v944
  %v950 = vunpack.c.l.b16 %v848
  %v951 = vunpack.c.h.b16 %v848
  %v952 = vunpack.c.l.b16 %v849
  %v953 = vunpack.c.h.b16 %v849
  %v954 = vpack.c.b16 %v952, %v950
  %v955 = vpack.c.b16 %v953, %v951
  %v960 = vunpack.c.l.b16 %v894
  %v961 = vunpack.c.h.b16 %v894
  %v962 = vunpack.c.l.b16 %v895
  %v963 = vunpack.c.h.b16 %v895
  %v964 = vpack.c.b16 %v962, %v960
  %v965 = vpack.c.b16 %v963, %v961
  %v970 = vunpack.c.l.b16 %v946
  %v971 = vunpack.c.h.b16 %v946
  %v972 = vunpack.c.l.b16 %v947
  %v973 = vunpack.c.h.b16 %v947
  %v974 = vpack.c.b16 %v972, %v970
  %v975 = vpack.c.b16 %v973, %v971
  %v978 = vld [vmem:[%s4] sm:$0xf]
  %v979 = vld [vmem:[%s4 + $0x4] sm:$0xf]
  %v980 = vld [vmem:[%s4 + $0x8] sm:$0xf]
  %v981 = vld [vmem:[%s4 + $0xc] sm:$0xf]
  %v982 = vld [vmem:[%s4 + $0x10] sm:$0xf]
  %v983 = vld [vmem:[%s4 + $0x14] sm:$0xf]
  %v984 = vld [vmem:[%s4 + $0x18] sm:$0xf]
  %v985 = vld [vmem:[%s4 + $0x1c] sm:$0xf]
  %v986 = vld [vmem:[%s4 + $0x20] sm:$0xf]
  %v987 = vld [vmem:[%s4 + $0x24] sm:$0xf]
  %v988 = vld [vmem:[%s4 + $0x28] sm:$0xf]
  %v989 = vld [vmem:[%s4 + $0x2c] sm:$0xf]
  %v990 = vld [vmem:[%s4 + $0x30] sm:$0xf]
  %v991 = vld [vmem:[%s4 + $0x34] sm:$0xf]
  %v992 = vld [vmem:[%s4 + $0x38] sm:$0xf]
  %v993 = vld [vmem:[%s4 + $0x3c] sm:$0xf]
  %v994 = vld [vmem:[%s4 + $0x40] sm:$0xf]
  %v995 = vld [vmem:[%s4 + $0x44] sm:$0xf]
  %v996 = vld [vmem:[%s4 + $0x48] sm:$0xf]
  %v997 = vld [vmem:[%s4 + $0x4c] sm:$0xf]
  %v998 = vld [vmem:[%s4 + $0x50] sm:$0xf]
  %v999 = vld [vmem:[%s4 + $0x54] sm:$0xf]
  %v1000 = vld [vmem:[%s4 + $0x58] sm:$0xf]
  %v1001 = vld [vmem:[%s4 + $0x5c] sm:$0xf]
  %v1002 = vld [vmem:[%s4 + $0x60] sm:$0xf]
  %v1003 = vld [vmem:[%s4 + $0x64] sm:$0xf]
  %v1004 = vld [vmem:[%s4 + $0x68] sm:$0xf]
  %v1005 = vld [vmem:[%s4 + $0x6c] sm:$0xf]
  %v1006 = vld [vmem:[%s4 + $0x70] sm:$0xf]
  %v1007 = vld [vmem:[%s4 + $0x74] sm:$0xf]
  %v1008 = vld [vmem:[%s4 + $0x78] sm:$0xf]
  %v1009 = vld [vmem:[%s4 + $0x7c] sm:$0xf]
  %v1042 = vunpack.c.l.b16 %v978
  %v1043 = vunpack.c.l.b16 %v979
  %v1044 = vunpack.c.l.b16 %v980
  %v1045 = vunpack.c.l.b16 %v981
  %v1046 = vunpack.c.l.b16 %v982
  %v1047 = vunpack.c.l.b16 %v983
  %v1048 = vunpack.c.l.b16 %v984
  %v1049 = vunpack.c.l.b16 %v985
  %v1050 = vunpack.c.l.b16 %v986
  %v1051 = vunpack.c.l.b16 %v987
  %v1052 = vunpack.c.l.b16 %v988
  %v1053 = vunpack.c.l.b16 %v989
  %v1054 = vunpack.c.l.b16 %v990
  %v1055 = vunpack.c.l.b16 %v991
  %v1056 = vunpack.c.l.b16 %v992
  %v1057 = vunpack.c.l.b16 %v993
  %v1058 = vunpack.c.l.b16 %v994
  %v1059 = vunpack.c.l.b16 %v995
  %v1060 = vunpack.c.l.b16 %v996
  %v1061 = vunpack.c.l.b16 %v997
  %v1062 = vunpack.c.l.b16 %v998
  %v1063 = vunpack.c.l.b16 %v999
  %v1064 = vunpack.c.l.b16 %v1000
  %v1065 = vunpack.c.l.b16 %v1001
  %v1066 = vunpack.c.l.b16 %v1002
  %v1067 = vunpack.c.l.b16 %v1003
  %v1068 = vunpack.c.l.b16 %v1004
  %v1069 = vunpack.c.l.b16 %v1005
  %v1070 = vunpack.c.l.b16 %v1006
  %v1071 = vunpack.c.l.b16 %v1007
  %v1072 = vunpack.c.l.b16 %v1008
  %v1073 = vunpack.c.l.b16 %v1009
  %v1074 = vpack.c.b16 %v1043, %v1042
  %v1075 = vpack.c.b16 %v1045, %v1044
  %v1076 = vpack.c.b16 %v1047, %v1046
  %v1077 = vpack.c.b16 %v1049, %v1048
  %v1078 = vpack.c.b16 %v1051, %v1050
  %v1079 = vpack.c.b16 %v1053, %v1052
  %v1080 = vpack.c.b16 %v1055, %v1054
  %v1081 = vpack.c.b16 %v1057, %v1056
  %v1082 = vpack.c.b16 %v1059, %v1058
  %v1083 = vpack.c.b16 %v1061, %v1060
  %v1084 = vpack.c.b16 %v1063, %v1062
  %v1085 = vpack.c.b16 %v1065, %v1064
  %v1086 = vpack.c.b16 %v1067, %v1066
  %v1087 = vpack.c.b16 %v1069, %v1068
  %v1088 = vpack.c.b16 %v1071, %v1070
  %v1089 = vpack.c.b16 %v1073, %v1072
  %1106 = vmatpush.bf16.msra.mxu0 %v1081
  %1107 = vmatpush.bf16.msra.mxu0 %v1080
  %1108 = vmatpush.bf16.msra.mxu0 %v1079
  %1109 = vmatpush.bf16.msra.mxu0 %v1078
  %1110 = vmatpush.bf16.msra.mxu0 %v1077
  %1111 = vmatpush.bf16.msra.mxu0 %v1076
  %1112 = vmatpush.bf16.msra.mxu0 %v1075
  %1113 = vmatpush.bf16.msra.mxu0 %v1074
  %1114 = vmatmul.bf16.gmra.mxu0 %v954
  %v1115 = vpop.f32.mrf.mxu0
  %v1116 = vadd.f32 0.0, %v1115
  %v1117 = vpop.f32.mrf.mxu0
  %v1118 = vadd.f32 0.0, %v1117
  %1119 = vmatmul.bf16.gmra.mxu0 %v964
  %v1120 = vpop.f32.mrf.mxu0
  %v1121 = vadd.f32 0.0, %v1120
  %v1122 = vpop.f32.mrf.mxu0
  %v1123 = vadd.f32 0.0, %v1122
  %1124 = vmatmul.bf16.gmra.mxu0 %v974
  %v1125 = vpop.f32.mrf.mxu0
  %v1126 = vadd.f32 0.0, %v1125
  %v1127 = vpop.f32.mrf.mxu0
  %v1128 = vadd.f32 0.0, %v1127
  %1129 = vdwg.mxu0
  %1130 = vmatpush.bf16.msra.mxu0 %v1089
  %1131 = vmatpush.bf16.msra.mxu0 %v1088
  %1132 = vmatpush.bf16.msra.mxu0 %v1087
  %1133 = vmatpush.bf16.msra.mxu0 %v1086
  %1134 = vmatpush.bf16.msra.mxu0 %v1085
  %1135 = vmatpush.bf16.msra.mxu0 %v1084
  %1136 = vmatpush.bf16.msra.mxu0 %v1083
  %1137 = vmatpush.bf16.msra.mxu0 %v1082
  %1138 = vmatmul.bf16.gmra.mxu0 %v955
  %v1139 = vpop.f32.mrf.mxu0
  %v1140 = vadd.f32 %v1116, %v1139
  %v1141 = vpop.f32.mrf.mxu0
  %v1142 = vadd.f32 %v1118, %v1141
  %1143 = vmatmul.bf16.gmra.mxu0 %v965
  %v1144 = vpop.f32.mrf.mxu0
  %v1145 = vadd.f32 %v1121, %v1144
  %v1146 = vpop.f32.mrf.mxu0
  %v1147 = vadd.f32 %v1123, %v1146
  %1148 = vmatmul.bf16.gmra.mxu0 %v975
  %v1149 = vpop.f32.mrf.mxu0
  %v1150 = vadd.f32 %v1126, %v1149
  %v1151 = vpop.f32.mrf.mxu0
  %v1152 = vadd.f32 %v1128, %v1151
  %1153 = vdwg.mxu0
  %v1154 = vmul.f32 %v1140, %v1140
  %v1155 = vmul.f32 %v1142, %v1142
  %v1156 = vmul.f32 %v1145, %v1145
  %v1157 = vmul.f32 %v1147, %v1147
  %v1158 = vadd.f32 %v1154, %v1156
  %v1159 = vadd.f32 %v1155, %v1157
  %v1160 = vmul.f32 %v1150, %v1150
  %v1161 = vmul.f32 %v1152, %v1152
  %v1162 = vadd.f32 %v1158, %v1160
  %v1163 = vadd.f32 %v1159, %v1161
  %v1164 = vrsqrt.pop %v1162
  %v1165 = vmul.f32 %v1164, %v1162
  %v1166 = vmul.f32 %v1165, %v1164
  %v1167 = vmul.f32 0.5, %v1166
  %v1168 = vsub.f32 1.5, %v1167
  %v1169 = vmul.f32 %v1164, %v1168
  %v1170 = vmul.f32 %v1162, %v1169
  %vm1171 = vcmp.eq.f32.partialorder %v1162, inf
  %v1172 = vsel %vm1171, %v1162, %v1170
  %vm1173 = vcmp.eq.f32.partialorder %v1162, 0.0
  %v1174 = vand.u32 %v1162, 2147483648
  %v1175 = vsel %vm1173, %v1174, %v1172
  %v1176 = vrsqrt.pop %v1163
  %v1177 = vmul.f32 %v1176, %v1163
  %v1178 = vmul.f32 %v1177, %v1176
  %v1179 = vmul.f32 0.5, %v1178
  %v1180 = vsub.f32 1.5, %v1179
  %v1181 = vmul.f32 %v1176, %v1180
  %v1182 = vmul.f32 %v1163, %v1181
  %vm1183 = vcmp.eq.f32.partialorder %v1163, inf
  %v1184 = vsel %vm1183, %v1163, %v1182
  %vm1185 = vcmp.eq.f32.partialorder %v1163, 0.0
  %v1186 = vand.u32 %v1163, 2147483648
  %v1187 = vsel %vm1185, %v1186, %v1184
  %1188 = vst [vmem:[%s5] sm:$0xff] %v1175
  %1189 = vst [vmem:[%s5 + $0x8] sm:$0xff] %v1187
  %1190 = vrot.lane.b32.xlu0 %v664, 2
  %v1191 = vpop.permute.xlu0 %1190
  %1192 = vrot.lane.b32.xlu0 %v665, 2
  %v1193 = vpop.permute.xlu0 %1192
  %1196 = vrot.lane.b32.xlu0 %v744, 2
  %v1197 = vpop.permute.xlu0 %1196
  %1198 = vrot.lane.b32.xlu0 %v745, 2
  %v1199 = vpop.permute.xlu0 %1198
  %1202 = vrot.lane.b32.xlu0 %v746, 3
  %v1203 = vpop.permute.xlu0 %1202
  %1204 = vrot.lane.b32.xlu0 %v747, 3
  %v1205 = vpop.permute.xlu0 %1204
  %1208 = vrot.lane.b32.xlu0 %v748, 4
  %v1209 = vpop.permute.xlu0 %1208
  %1210 = vrot.lane.b32.xlu0 %v749, 4
  %v1211 = vpop.permute.xlu0 %1210
  %1214 = vrot.lane.b32.xlu0 %v770, 6
  %v1215 = vpop.permute.xlu0 %1214
  %1216 = vrot.lane.b32.xlu0 %v771, 6
  %v1217 = vpop.permute.xlu0 %1216
  %1220 = vrot.lane.b32.xlu0 %v784, 7
  %v1221 = vpop.permute.xlu0 %1220
  %1222 = vrot.lane.b32.xlu0 %v785, 7
  %v1223 = vpop.permute.xlu0 %1222
  %1226 = vrot.lane.b32.xlu0 %v790, 8
  %v1227 = vpop.permute.xlu0 %1226
  %1228 = vrot.lane.b32.xlu0 %v791, 8
  %v1229 = vpop.permute.xlu0 %1228
  %vm1232 = vcmask 7168
  %v1233 = vsel %vm1232, %v660, %v679
  %v1234 = vsel %vm1232, %v661, %v681
  %vm1235 = vcmask 15360
  %v1236 = vsel %vm1235, %v1233, %v1191
  %v1237 = vsel %vm1235, %v1234, %v1193
  %vm1238 = vcmask 23552
  %v1239 = vsel %vm1238, %v1236, %v1197
  %v1240 = vsel %vm1238, %v1237, %v1199
  %vm1241 = vcmask 31744
  %v1242 = vsel %vm1241, %v1239, %v1203
  %v1243 = vsel %vm1241, %v1240, %v1205
  %vm1244 = vcmask 39936
  %v1245 = vsel %vm1244, %v1242, %v1209
  %v1246 = vsel %vm1244, %v1243, %v1211
  %vm1247 = vcmask 48128
  %v1248 = vsel %vm1247, %v1245, %v1215
  %v1249 = vsel %vm1247, %v1246, %v1217
  %vm1250 = vcmask 56320
  %v1251 = vsel %vm1250, %v1248, %v1221
  %v1252 = vsel %vm1250, %v1249, %v1223
  %vm1253 = vcmask 64512
  %v1254 = vsel %vm1253, %v1251, %v1227
  %v1255 = vsel %vm1253, %v1252, %v1229
  %vm1256 = vcmask 72704
  %1257 = vst.msk [vmem:[%s6] sm:$0xff] %vm1256, %v1254
  %1258 = vst.msk [vmem:[%s6 + $0x8] sm:$0xff] %vm1256, %v1255
  // Predicated region
  $region22: #{equiv_transformer_forward.1} parent=0 // pred_check
    _
  $region23: #{equiv_transformer_forward.1} parent=0 // pred_check_branch
    %1260 = sbr.rel (0) target = $region25
  $region24: #{equiv_transformer_forward.1} parent=0 // pred_region
    _
  $region25: #{equiv_transformer_forward.1} parent=0 // pred_fallthru
    _
  // Predicated region
  $region26: #{equiv_transformer_forward.1} parent=0 // pred_check
    _
  $region27: #{equiv_transformer_forward.1} parent=0 // pred_check_branch
    %1262 = sbr.rel (0) target = $region29
  $region28: #{equiv_transformer_forward.1} parent=0 // pred_region
    _
  $region29: #{equiv_transformer_forward.1} parent=0 // pred_fallthru
    _
  // Predicated region
  $region30: #{equiv_transformer_forward.1} parent=0 // pred_check
    _
  $region31: #{equiv_transformer_forward.1} parent=0 // pred_check_branch
    %1264 = sbr.rel (0) target = $region33
  $region32: #{equiv_transformer_forward.1} parent=0 // pred_region
    _
  $region33: #{equiv_transformer_forward.1} parent=0 // pred_fallthru
    _
  // Predicated region
  $region34: #{equiv_transformer_forward.1} parent=0 // pred_check
    _
  $region35: #{equiv_transformer_forward.1} parent=0 // pred_check_branch
    %1266 = sbr.rel (0) target = $region37
  $region36: #{equiv_transformer_forward.1} parent=0 // pred_region
    _
  $region37: #{equiv_transformer_forward.1} parent=0 // pred_fallthru
    _

</llo_original>
